<compile_context>
chip_gen: v5e
topology: v5e:2x2
jax: 0.10.0
libtpu: 0.0.40
codegen_flags: <defaults>
</compile_context>

<pallas_src>
import jax
import jax.numpy as jnp
from jax.experimental import pallas as pl
from jax.experimental.pallas import tpu as pltpu

LEAKY_SLOPE = 0.1
BN_EPS = 1e-5


def _round_up(x, m):
    return (x + m - 1) // m * m


def _lrelu(x):
    return jnp.where(x > 0, x, LEAKY_SLOPE * x)


def _chan_pad(compute_dtype):
    # native sublane tile: 8 rows of 32-bit -> 16 rows for bf16
    return 8 * 4 // jnp.dtype(compute_dtype).itemsize


# ----------------------------------------------------------------------------
# Fused block kernel (channel-major layout: activations are (C, H*W) matrices).
# ----------------------------------------------------------------------------
def _make_block_kernel(H, W, dilation, cin_p, cout_p, is_up, is_down,
                       compute_dtype):
    M = H * W
    d = dilation
    # Static lane offsets of the 9 dilated 3x3 taps (row-major kh, kw) and of
    # the 4 stride-2 down-conv taps, in the flattened p = h*W + w pixel index.
    conv_offs = [((kh - 1) * d) * W + (kw - 1) * d
                 for kh in range(3) for kw in range(3)]
    down_offs = [di * W + dj for di in range(2) for dj in range(2)]

    def shifted(a2d, off):
        # a2d[:, p + off] with wrap-around; the wrap is cancelled by the tap
        # masks (3x3 taps) or by the stride-2 decimation (down taps).
        shift = (-off) % M
        return pltpu.roll(a2d, shift, 1) if shift else a2d

    def kernel(x_ref, mask_ref, w1_ref, b1_ref, w2_ref, b2_ref, *rest):
        i = 0
        if is_up:
            wu_ref, bu_ref = rest[i], rest[i + 1]
            i += 2
        if is_down:
            wd_ref, bd_ref, selw_ref = rest[i], rest[i + 1], rest[i + 2]
            i += 3
        o_ref = rest[i]
        i += 1
        if is_up:
            ou_ref = rest[i]
            i += 1
        if is_down:
            od_ref = rest[i]
            i += 1
        col_ref = rest[i]                                     # VMEM scratch

        mask = mask_ref[...]                                  # (9, M), compute dtype

        def build_cols(a2d, c):
            # "Transposed im2col" written tap-by-tap into the (reused) compute
            # dtype scratch: col_ref[t*c:(t+1)*c, :] = roll(a2d) * mask_t.
            # No f32 materialization, no concat.
            for t, off in enumerate(conv_offs):
                col_ref[t * c:(t + 1) * c, :] = shifted(a2d, off) * mask[t:t + 1, :]

        # ---- conv1: one MXU matmul with K = 9*cin_p (BN scale pre-folded) ----
        x2d = x_ref[0]                                        # (cin_p, M), bf16
        build_cols(x2d, cin_p)
        y1 = jnp.dot(w1_ref[...], col_ref[0:9 * cin_p, :],
                     preferred_element_type=jnp.float32)
        x1 = _lrelu(y1 + b1_ref[...])                         # f32 (cout_p, M)

        # ---- conv2 + residual (DoubleConv tail); x1 never leaves VMEM ----
        x1c = x1.astype(compute_dtype)
        build_cols(x1c, cout_p)
        y2 = jnp.dot(w2_ref[...], col_ref[0:9 * cout_p, :],
                     preferred_element_type=jnp.float32)
        x2 = _lrelu(y2 + b2_ref[...])
        out = _lrelu(x2 + x1)                                 # f32 (cout_p, M)

        out_cast = out.astype(compute_dtype)
        o_ref[0] = out_cast.astype(o_ref.dtype)               # bf16 writeback

        if is_up:
            # ConvTranspose2d(k=2, s=2): per-pixel matmul on the resident out;
            # the 4-plane -> (2H, 2W) depth-to-space unpack is done in XLA, in
            # the compute dtype (bf16 on the production path).
            yu = jnp.dot(wu_ref[...], out_cast,
                         preferred_element_type=jnp.float32)
            ou_ref[0] = _lrelu(yu + bu_ref[...]).astype(ou_ref.dtype)

        if is_down:
            # Conv2d(k=2, s=2): 2x2 taps via lane rolls packed into the shared
            # scratch -> one K=4*cout_p matmul over all pixels, then stride-2
            # decimation WITHOUT the O(M^2) selection matmul:
            #   * even rows picked via static lane slices (one per row pair),
            #   * even columns via a tiny (W, W/2) 0/1 matmul per kept row,
            #   * bias + LeakyReLU only on the kept M/4 pixels.
            # Wrapped roll taps only touch odd rows/cols, which are discarded.
            for t, off in enumerate(down_offs):
                col_ref[t * cout_p:(t + 1) * cout_p, :] = shifted(out_cast, off)
            z = jnp.dot(wd_ref[...], col_ref[0:4 * cout_p, :],
                        preferred_element_type=jnp.float32)   # (cd_p, M)
            bd = bd_ref[...]                                  # (cd_p, 1)
            selw = selw_ref[...]                              # (W, W//2)
            for r in range(H // 2):
                z_row = z[:, (2 * r) * W:(2 * r) * W + W]     # even row 2r
                yd = jnp.dot(z_row.astype(compute_dtype), selw,
                             preferred_element_type=jnp.float32)
                od_ref[0, :, r, :] = _lrelu(yd + bd).astype(od_ref.dtype)

    return kernel


def block_pallas(x2d, prep, *, is_up, is_down, compute_dtype):
    N, cin_p, M = x2d.shape
    H, W, d = prep["H"], prep["W"], prep["dilation"]
    cout_p = prep["w1t"].shape[0]
    cmax = max(cin_p, cout_p)

    kernel = _make_block_kernel(H, W, d, cin_p, cout_p, is_up, is_down,
                                compute_dtype)

    inputs = [x2d, prep["tap_mask"], prep["w1t"], prep["b1"],
              prep["w2t"], prep["b2"]]
    in_specs = [
        pl.BlockSpec((1, cin_p, M), lambda n: (n, 0, 0)),
        pl.BlockSpec(prep["tap_mask"].shape, lambda n: (0, 0)),
        pl.BlockSpec(prep["w1t"].shape, lambda n: (0, 0)),
        pl.BlockSpec(prep["b1"].shape, lambda n: (0, 0)),
        pl.BlockSpec(prep["w2t"].shape, lambda n: (0, 0)),
        pl.BlockSpec(prep["b2"].shape, lambda n: (0, 0)),
    ]
    out_shape = [jax.ShapeDtypeStruct((N, cout_p, M), compute_dtype)]
    out_specs = [pl.BlockSpec((1, cout_p, M), lambda n: (n, 0, 0))]

    if is_up:
        cu4_p = prep["wut"].shape[0]
        inputs += [prep["wut"], prep["bu"]]
        in_specs += [pl.BlockSpec(prep["wut"].shape, lambda n: (0, 0)),
                     pl.BlockSpec(prep["bu"].shape, lambda n: (0, 0))]
        out_shape.append(jax.ShapeDtypeStruct((N, cu4_p, M), compute_dtype))
        out_specs.append(pl.BlockSpec((1, cu4_p, M), lambda n: (n, 0, 0)))
    if is_down:
        cd_p = prep["wdt"].shape[0]
        inputs += [prep["wdt"], prep["bd"], prep["selw"]]
        in_specs += [pl.BlockSpec(prep["wdt"].shape, lambda n: (0, 0)),
                     pl.BlockSpec(prep["bd"].shape, lambda n: (0, 0)),
                     pl.BlockSpec(prep["selw"].shape, lambda n: (0, 0))]
        # Down output is produced directly in NCHW.
        out_shape.append(
            jax.ShapeDtypeStruct((N, cd_p, H // 2, W // 2), compute_dtype))
        out_specs.append(
            pl.BlockSpec((1, cd_p, H // 2, W // 2), lambda n: (n, 0, 0, 0)))

    return pl.pallas_call(
        kernel,
        out_shape=tuple(out_shape),
        grid=(N,),
        in_specs=in_specs,
        out_specs=tuple(out_specs),
        # One compute-dtype scratch reused for conv1 / conv2 im2col and the
        # down-head 2x2 taps.
        scratch_shapes=[pltpu.VMEM((9 * cmax, M), compute_dtype)],
        compiler_params=pltpu.CompilerParams(
            dimension_semantics=("parallel",),
            vmem_limit_bytes=48 * 1024 * 1024,   # safe on v7x (64 MiB), above
        ),                                        # the 16/32 MiB scoped default
    )(*inputs)


# ----------------------------------------------------------------------------
# One-time parameter preprocessing (hoisted off the per-call critical path).
# ----------------------------------------------------------------------------
def preprocess_block_params(p, in_c, out_c, H, W, dilation, is_up, is_down,
                            compute_dtype):
    if is_up or is_down:
        assert H % 2 == 0 and W % 2 == 0, "up/down heads require even H, W"
    if is_up:
        assert out_c % 2 == 0

    d = dilation
    pad = _chan_pad(compute_dtype)
    cin_p = _round_up(in_c, pad)
    cout_p = _round_up(out_c, pad)

    def fold3x3(w_oihw, scale, ci, ci_p, co, co_p):
        # -> (co_p, 9*ci_p), K ordered (kh, kw, cin); BN scale folded into rows;
        # padded rows/cols are zero so padded channels stay exactly zero.
        w = jnp.transpose(w_oihw, (0, 2, 3, 1)) * scale[:, None, None, None]
        w = jnp.pad(w, ((0, co_p - co), (0, 0), (0, 0), (0, ci_p - ci)))
        return w.reshape(co_p, 9 * ci_p).astype(compute_dtype)

    prep = {"H": H, "W": W, "dilation": d, "out_c": out_c,
            "cin_p": cin_p, "cout_p": cout_p}

    prep["w1t"] = fold3x3(p["w1_oihw"], p["s1"], in_c, cin_p, out_c, cout_p)
    prep["b1"] = jnp.pad(p["b1"], (0, cout_p - out_c)).reshape(cout_p, 1).astype(jnp.float32)
    prep["w2t"] = fold3x3(p["w2_oihw"], p["s2"], out_c, cout_p, out_c, cout_p)
    prep["b2"] = jnp.pad(p["b2"], (0, cout_p - out_c)).reshape(cout_p, 1).astype(jnp.float32)

    if is_up:
        cu = out_c // 2
        cu4 = 4 * cu
        cu4_p = _round_up(cu4, pad)
        wu = jnp.transpose(p["wu_iokk"], (2, 3, 1, 0))        # (di, dj, oc, ic)
        wu = wu * p["su"][None, None, :, None]
        wu = jnp.pad(wu, ((0, 0), (0, 0), (0, 0), (0, cout_p - out_c)))
        wu = wu.reshape(cu4, cout_p)
        wu = jnp.pad(wu, ((0, cu4_p - cu4), (0, 0)))
        prep["wut"] = wu.astype(compute_dtype)
        bu = jnp.pad(jnp.tile(p["bu"], 4), (0, cu4_p - cu4))
        prep["bu"] = bu.reshape(cu4_p, 1).astype(jnp.float32)

    if is_down:
        cd = 2 * out_c
        cd_p = _round_up(cd, pad)
        wd = jnp.transpose(p["wd_oihw"], (0, 2, 3, 1))        # (oc2, di, dj, ic)
        wd = wd * p["sd"][:, None, None, None]
        wd = jnp.pad(wd, ((0, cd_p - cd), (0, 0), (0, 0), (0, cout_p - out_c)))
        prep["wdt"] = wd.reshape(cd_p, 4 * cout_p).astype(compute_dtype)
        prep["bd"] = jnp.pad(p["bd"], (0, cd_p - cd)).reshape(cd_p, 1).astype(jnp.float32)
        # Small per-row column selector (W, W/2): picks even columns.  O(W^2)
        # memory / O(M*W) flops instead of the previous O(M^2) selection matmul.
        selw = (jnp.arange(W)[:, None] == 2 * jnp.arange(W // 2)[None, :])
        prep["selw"] = selw.astype(compute_dtype)

    # Boundary masks of the 9 dilated taps (emulate zero padding), shared by
    # conv1 and conv2; kept in the compute dtype so masking runs on bf16 VPU.
    hh = jnp.arange(H)[:, None]
    ww = jnp.arange(W)[None, :]
    masks = []
    for kh in range(3):
        for kw in range(3):
            dh, dw = (kh - 1) * d, (kw - 1) * d
            m = ((hh + dh >= 0) & (hh + dh < H) & (ww + dw >= 0) & (ww + dw < W))
            masks.append(m.reshape(-1))
    prep["tap_mask"] = jnp.stack(masks).astype(compute_dtype)   # (9, M)
    return prep


# ----------------------------------------------------------------------------
# Public forward: NCHW in, NCHW out (PyTorch convention); NCHW is already the
# kernel's native channel-major layout, so only cheap reshapes happen here.
# Outputs are emitted in the compute dtype (bf16 on the production path).
# ----------------------------------------------------------------------------
def block_forward(x_nchw, prep, *, is_up, is_down, compute_dtype=jnp.bfloat16):
    N, in_c, H, W = x_nchw.shape
    M = H * W
    out_c = prep["out_c"]
    cin_p = prep["cin_p"]

    x2d = x_nchw.reshape(N, in_c, M).astype(compute_dtype)
    if cin_p != in_c:
        x2d = jnp.pad(x2d, ((0, 0), (0, cin_p - in_c), (0, 0)))

    outs = block_pallas(x2d, prep, is_up=is_up, is_down=is_down,
                        compute_dtype=compute_dtype)
    if not isinstance(outs, (tuple, list)):
        outs = (outs,)

    i = 0
    out = outs[i][:, :out_c, :].reshape(N, out_c, H, W)
    i += 1
    results = [out]
    if is_up:
        cu = out_c // 2
        yu = outs[i][:, :4 * cu, :]
        i += 1
        # depth-to-space unpack in the compute dtype (bf16) -> half the HBM
        # traffic of the previous f32 unpack.
        yu = yu.reshape(N, 2, 2, cu, H, W).transpose(0, 3, 4, 1, 5, 2)
        results.append(yu.reshape(N, cu, 2 * H, 2 * W))
    if is_down:
        yd = outs[i][:, :2 * out_c, :, :]      # already NCHW (N, 2C, H/2, W/2)
        i += 1
        results.append(yd)
    return results[0] if len(results) == 1 else tuple(results)


# ----------------------------------------------------------------------------
# Deterministic synthetic parameters (PyTorch weight layouts).
# ----------------------------------------------------------------------------
def _fold_bn(key, c):
    k1, k2, k3, k4 = jax.random.split(key, 4)
    gamma = 1.0 + 0.1 * jax.random.normal(k1, (c,), jnp.float32)
    beta = 0.1 * jax.random.normal(k2, (c,), jnp.float32)
    mean = 0.1 * jax.random.normal(k3, (c,), jnp.float32)
    var = jnp.abs(jax.random.normal(k4, (c,), jnp.float32)) + 1.0
    s = gamma / jnp.sqrt(var + BN_EPS)
    b = beta - mean * s
    return s, b


def make_block_params(key, in_c, out_c, is_up, is_down):
    ks = jax.random.split(key, 8)
    p = {}
    p["w1_oihw"] = jax.random.normal(ks[0], (out_c, in_c, 3, 3), jnp.float32) / jnp.sqrt(9.0 * in_c)
    p["s1"], p["b1"] = _fold_bn(ks[1], out_c)
    p["w2_oihw"] = jax.random.normal(ks[2], (out_c, out_c, 3, 3), jnp.float32) / jnp.sqrt(9.0 * out_c)
    p["s2"], p["b2"] = _fold_bn(ks[3], out_c)
    if is_up:
        p["wu_iokk"] = jax.random.normal(ks[4], (out_c, out_c // 2, 2, 2), jnp.float32) / jnp.sqrt(4.0 * out_c)
        p["su"], p["bu"] = _fold_bn(ks[5], out_c // 2)
    if is_down:
        p["wd_oihw"] = jax.random.normal(ks[6], (2 * out_c, out_c, 2, 2), jnp.float32) / jnp.sqrt(4.0 * out_c)
        p["sd"], p["bd"] = _fold_bn(ks[7], 2 * out_c)
    return p


# ----------------------------------------------------------------------------
# Pure-JAX reference (eval-mode PyTorch semantics).
# ----------------------------------------------------------------------------
def reference_block(x_nchw, p, dilation, is_up, is_down):
    def conv_bn_lrelu(x, w_oihw, s, b, d):
        y = jax.lax.conv_general_dilated(
            x, w_oihw, window_strides=(1, 1), padding=[(d, d), (d, d)],
            rhs_dilation=(d, d), dimension_numbers=("NCHW", "OIHW", "NCHW"))
        y = y * s[None, :, None, None] + b[None, :, None, None]
        return _lrelu(y)

    x1 = conv_bn_lrelu(x_nchw, p["w1_oihw"], p["s1"], p["b1"], dilation)
    x2 = conv_bn_lrelu(x1, p["w2_oihw"], p["s2"], p["b2"], dilation)
    out = _lrelu(x2 + x1)
    res = [out]
    if is_up:
        N, C, H, W = out.shape
        y = jnp.einsum("ncij,cokl->noikjl", out, p["wu_iokk"]).reshape(N, C // 2, 2 * H, 2 * W)
        y = y * p["su"][None, :, None, None] + p["bu"][None, :, None, None]
        res.append(_lrelu(y))
    if is_down:
        y = jax.lax.conv_general_dilated(
            out, p["wd_oihw"], window_strides=(2, 2), padding="VALID",
            dimension_numbers=("NCHW", "OIHW", "NCHW"))
        y = y * p["sd"][None, :, None, None] + p["bd"][None, :, None, None]
        res.append(_lrelu(y))
    return res[0] if len(res) == 1 else tuple(res)


# TODO(synk): training-mode DropBlock (stochastic bernoulli mask + max_pool) and
# BatchNorm batch statistics are not implemented; this reproduces eval-mode
# (inference) forward semantics.

if __name__ == "__main__":
    key = jax.random.PRNGKey(0)
    k_x, k_p = jax.random.split(key)

    N, in_c, H, W = 2, 4, 16, 16
    out_c = 8
    dilation = 1
    is_up, is_down = True, True   # exercise all branches: returns (x, x_up, x_down)

    x = jax.random.normal(k_x, (N, in_c, H, W), jnp.float32)
    params = make_block_params(k_p, in_c, out_c, is_up, is_down)

    refs = jax.block_until_ready(reference_block(x, params, dilation, is_up, is_down))
    expected_shapes = [(N, out_c, H, W), (N, out_c // 2, 2 * H, 2 * W),
                       (N, 2 * out_c, H // 2, W // 2)]

    # f32 compute path (structural / indexing check).
    prep32 = preprocess_block_params(params, in_c, out_c, H, W, dilation,
                                     is_up, is_down, jnp.float32)
    outs32 = jax.block_until_ready(
        block_forward(x, prep32, is_up=is_up, is_down=is_down,
                      compute_dtype=jnp.float32))
    for o, r, es in zip(outs32, refs, expected_shapes):
        assert o.shape == es, (o.shape, es)
        o32 = jnp.asarray(o, jnp.float32)
        err = float(jnp.max(jnp.abs(o32 - r)))
        # Tolerance covers MXU bf16-pass rounding of f32 operands; structural
        # errors (wrong tap/mask/packing/decimation) are O(1) and still caught.
        assert jnp.allclose(o32, r, rtol=5e-2, atol=5e-2), err

    # bf16 production path (bf16 operands, f32 accumulation, bf16 outputs).
    prep16 = preprocess_block_params(params, in_c, out_c, H, W, dilation,
                                     is_up, is_down, jnp.bfloat16)
    outs16 = jax.block_until_ready(
        block_forward(x, prep16, is_up=is_up, is_down=is_down,
                      compute_dtype=jnp.bfloat16))
    for o, r, es in zip(outs16, refs, expected_shapes):
        assert o.shape == es, (o.shape, es)
        o32 = jnp.asarray(o, jnp.float32)
        err = float(jnp.max(jnp.abs(o32 - r)))
        assert jnp.allclose(o32, r, rtol=5e-2, atol=1e-1), err

    print("KERNEL_OK")
</pallas_src>

<mosaic_0001>
module attributes {stable_mosaic.version = 11 : i64} {
  func.func @kernel(%arg0: i32, %arg1: memref<1x8x256xf32, #tpu.memory_space<vmem>>, %arg2: memref<9x256xf32, #tpu.memory_space<vmem>>, %arg3: memref<8x72xf32, #tpu.memory_space<vmem>>, %arg4: memref<8x1xf32, #tpu.memory_space<vmem>>, %arg5: memref<8x72xf32, #tpu.memory_space<vmem>>, %arg6: memref<8x1xf32, #tpu.memory_space<vmem>>, %arg7: memref<16x8xf32, #tpu.memory_space<vmem>>, %arg8: memref<16x1xf32, #tpu.memory_space<vmem>>, %arg9: memref<16x32xf32, #tpu.memory_space<vmem>>, %arg10: memref<16x1xf32, #tpu.memory_space<vmem>>, %arg11: memref<16x8xf32, #tpu.memory_space<vmem>>, %arg12: memref<1x8x256xf32, #tpu.memory_space<vmem>>, %arg13: memref<1x16x256xf32, #tpu.memory_space<vmem>>, %arg14: memref<1x16x8x8xf32, #tpu.memory_space<vmem>>, %arg15: memref<72x256xf32, #tpu.memory_space<vmem>>) attributes {dimension_semantics = [#tpu.dimension_semantics<parallel>], iteration_bounds = array<i64: 2>, scalar_prefetch = 0 : i64, scratch_operands = 1 : i64, tpu.core_type = #tpu.core_type<tc>, window_params = [{transform_indices = @transform_0, window_bounds = array<i64: 1, 8, 256>}, {pipeline_mode = #tpu.pipeline_mode<synchronous>, transform_indices = @transform_1, window_bounds = array<i64: 9, 256>}, {pipeline_mode = #tpu.pipeline_mode<synchronous>, transform_indices = @transform_2, window_bounds = array<i64: 8, 72>}, {pipeline_mode = #tpu.pipeline_mode<synchronous>, transform_indices = @transform_3, window_bounds = array<i64: 8, 1>}, {pipeline_mode = #tpu.pipeline_mode<synchronous>, transform_indices = @transform_4, window_bounds = array<i64: 8, 72>}, {pipeline_mode = #tpu.pipeline_mode<synchronous>, transform_indices = @transform_5, window_bounds = array<i64: 8, 1>}, {pipeline_mode = #tpu.pipeline_mode<synchronous>, transform_indices = @transform_6, window_bounds = array<i64: 16, 8>}, {pipeline_mode = #tpu.pipeline_mode<synchronous>, transform_indices = @transform_7, window_bounds = array<i64: 16, 1>}, {pipeline_mode = #tpu.pipeline_mode<synchronous>, transform_indices = @transform_8, window_bounds = array<i64: 16, 32>}, {pipeline_mode = #tpu.pipeline_mode<synchronous>, transform_indices = @transform_9, window_bounds = array<i64: 16, 1>}, {pipeline_mode = #tpu.pipeline_mode<synchronous>, transform_indices = @transform_10, window_bounds = array<i64: 16, 8>}, {transform_indices = @transform_11, window_bounds = array<i64: 1, 8, 256>}, {transform_indices = @transform_12, window_bounds = array<i64: 1, 16, 256>}, {transform_indices = @transform_13, window_bounds = array<i64: 1, 16, 8, 8>}]} {
    %c0 = arith.constant 0 : index
    %c0_0 = arith.constant 0 : index
    %0 = vector.load %arg2[%c0, %c0_0] : memref<9x256xf32, #tpu.memory_space<vmem>>, vector<9x256xf32>
    %c0_1 = arith.constant 0 : index
    %c0_2 = arith.constant 0 : index
    %c0_3 = arith.constant 0 : index
    %1 = vector.load %arg1[%c0_1, %c0_2, %c0_3] : memref<1x8x256xf32, #tpu.memory_space<vmem>>, vector<1x8x256xf32>
    %2 = vector.shape_cast %1 : vector<1x8x256xf32> to vector<8x256xf32>
    %c17_i32 = arith.constant 17 : i32
    %3 = tpu.dynamic_rotate %2 by %c17_i32 dim 1 : vector<8x256xf32>, i32 -> vector<8x256xf32>
    %4 = vector.extract_strided_slice %0 {offsets = [0, 0], sizes = [1, 256], strides = [1, 1]} : vector<9x256xf32> to vector<1x256xf32>
    %5 = vector.broadcast %4 : vector<1x256xf32> to vector<8x256xf32>
    %6 = arith.mulf %3, %5 : vector<8x256xf32>
    %c0_4 = arith.constant 0 : index
    %c0_5 = arith.constant 0 : index
    %7 = vector.load %arg15[%c0_4, %c0_5] : memref<72x256xf32, #tpu.memory_space<vmem>>, vector<8x256xf32>
    tpu.vector_store %arg15[%c0_4, %c0_5], %6 {strides = array<i32>} : memref<72x256xf32, #tpu.memory_space<vmem>>, vector<8x256xf32>,
    %c16_i32 = arith.constant 16 : i32
    %8 = tpu.dynamic_rotate %2 by %c16_i32 dim 1 : vector<8x256xf32>, i32 -> vector<8x256xf32>
    %9 = vector.extract_strided_slice %0 {offsets = [1, 0], sizes = [1, 256], strides = [1, 1]} : vector<9x256xf32> to vector<1x256xf32>
    %10 = vector.broadcast %9 : vector<1x256xf32> to vector<8x256xf32>
    %11 = arith.mulf %8, %10 : vector<8x256xf32>
    %c8 = arith.constant 8 : index
    %c0_6 = arith.constant 0 : index
    %12 = vector.load %arg15[%c8, %c0_6] : memref<72x256xf32, #tpu.memory_space<vmem>>, vector<8x256xf32>
    tpu.vector_store %arg15[%c8, %c0_6], %11 {strides = array<i32>} : memref<72x256xf32, #tpu.memory_space<vmem>>, vector<8x256xf32>,
    %c15_i32 = arith.constant 15 : i32
    %13 = tpu.dynamic_rotate %2 by %c15_i32 dim 1 : vector<8x256xf32>, i32 -> vector<8x256xf32>
    %14 = vector.extract_strided_slice %0 {offsets = [2, 0], sizes = [1, 256], strides = [1, 1]} : vector<9x256xf32> to vector<1x256xf32>
    %15 = vector.broadcast %14 : vector<1x256xf32> to vector<8x256xf32>
    %16 = arith.mulf %13, %15 : vector<8x256xf32>
    %c16 = arith.constant 16 : index
    %c0_7 = arith.constant 0 : index
    %17 = vector.load %arg15[%c16, %c0_7] : memref<72x256xf32, #tpu.memory_space<vmem>>, vector<8x256xf32>
    tpu.vector_store %arg15[%c16, %c0_7], %16 {strides = array<i32>} : memref<72x256xf32, #tpu.memory_space<vmem>>, vector<8x256xf32>,
    %c1_i32 = arith.constant 1 : i32
    %18 = tpu.dynamic_rotate %2 by %c1_i32 dim 1 : vector<8x256xf32>, i32 -> vector<8x256xf32>
    %19 = vector.extract_strided_slice %0 {offsets = [3, 0], sizes = [1, 256], strides = [1, 1]} : vector<9x256xf32> to vector<1x256xf32>
    %20 = vector.broadcast %19 : vector<1x256xf32> to vector<8x256xf32>
    %21 = arith.mulf %18, %20 : vector<8x256xf32>
    %c24 = arith.constant 24 : index
    %c0_8 = arith.constant 0 : index
    %22 = vector.load %arg15[%c24, %c0_8] : memref<72x256xf32, #tpu.memory_space<vmem>>, vector<8x256xf32>
    tpu.vector_store %arg15[%c24, %c0_8], %21 {strides = array<i32>} : memref<72x256xf32, #tpu.memory_space<vmem>>, vector<8x256xf32>,
    %23 = vector.extract_strided_slice %0 {offsets = [4, 0], sizes = [1, 256], strides = [1, 1]} : vector<9x256xf32> to vector<1x256xf32>
    %24 = vector.broadcast %23 : vector<1x256xf32> to vector<8x256xf32>
    %25 = arith.mulf %2, %24 : vector<8x256xf32>
    %c32 = arith.constant 32 : index
    %c0_9 = arith.constant 0 : index
    %26 = vector.load %arg15[%c32, %c0_9] : memref<72x256xf32, #tpu.memory_space<vmem>>, vector<8x256xf32>
    tpu.vector_store %arg15[%c32, %c0_9], %25 {strides = array<i32>} : memref<72x256xf32, #tpu.memory_space<vmem>>, vector<8x256xf32>,
    %c255_i32 = arith.constant 255 : i32
    %27 = tpu.dynamic_rotate %2 by %c255_i32 dim 1 : vector<8x256xf32>, i32 -> vector<8x256xf32>
    %28 = vector.extract_strided_slice %0 {offsets = [5, 0], sizes = [1, 256], strides = [1, 1]} : vector<9x256xf32> to vector<1x256xf32>
    %29 = vector.broadcast %28 : vector<1x256xf32> to vector<8x256xf32>
    %30 = arith.mulf %27, %29 : vector<8x256xf32>
    %c40 = arith.constant 40 : index
    %c0_10 = arith.constant 0 : index
    %31 = vector.load %arg15[%c40, %c0_10] : memref<72x256xf32, #tpu.memory_space<vmem>>, vector<8x256xf32>
    tpu.vector_store %arg15[%c40, %c0_10], %30 {strides = array<i32>} : memref<72x256xf32, #tpu.memory_space<vmem>>, vector<8x256xf32>,
    %c241_i32 = arith.constant 241 : i32
    %32 = tpu.dynamic_rotate %2 by %c241_i32 dim 1 : vector<8x256xf32>, i32 -> vector<8x256xf32>
    %33 = vector.extract_strided_slice %0 {offsets = [6, 0], sizes = [1, 256], strides = [1, 1]} : vector<9x256xf32> to vector<1x256xf32>
    %34 = vector.broadcast %33 : vector<1x256xf32> to vector<8x256xf32>
    %35 = arith.mulf %32, %34 : vector<8x256xf32>
    %c48 = arith.constant 48 : index
    %c0_11 = arith.constant 0 : index
    %36 = vector.load %arg15[%c48, %c0_11] : memref<72x256xf32, #tpu.memory_space<vmem>>, vector<8x256xf32>
    tpu.vector_store %arg15[%c48, %c0_11], %35 {strides = array<i32>} : memref<72x256xf32, #tpu.memory_space<vmem>>, vector<8x256xf32>,
    %c240_i32 = arith.constant 240 : i32
    %37 = tpu.dynamic_rotate %2 by %c240_i32 dim 1 : vector<8x256xf32>, i32 -> vector<8x256xf32>
    %38 = vector.extract_strided_slice %0 {offsets = [7, 0], sizes = [1, 256], strides = [1, 1]} : vector<9x256xf32> to vector<1x256xf32>
    %39 = vector.broadcast %38 : vector<1x256xf32> to vector<8x256xf32>
    %40 = arith.mulf %37, %39 : vector<8x256xf32>
    %c56 = arith.constant 56 : index
    %c0_12 = arith.constant 0 : index
    %41 = vector.load %arg15[%c56, %c0_12] : memref<72x256xf32, #tpu.memory_space<vmem>>, vector<8x256xf32>
    tpu.vector_store %arg15[%c56, %c0_12], %40 {strides = array<i32>} : memref<72x256xf32, #tpu.memory_space<vmem>>, vector<8x256xf32>,
    %c239_i32 = arith.constant 239 : i32
    %42 = tpu.dynamic_rotate %2 by %c239_i32 dim 1 : vector<8x256xf32>, i32 -> vector<8x256xf32>
    %43 = vector.extract_strided_slice %0 {offsets = [8, 0], sizes = [1, 256], strides = [1, 1]} : vector<9x256xf32> to vector<1x256xf32>
    %44 = vector.broadcast %43 : vector<1x256xf32> to vector<8x256xf32>
    %45 = arith.mulf %42, %44 : vector<8x256xf32>
    %c64 = arith.constant 64 : index
    %c0_13 = arith.constant 0 : index
    %46 = vector.load %arg15[%c64, %c0_13] : memref<72x256xf32, #tpu.memory_space<vmem>>, vector<8x256xf32>
    tpu.vector_store %arg15[%c64, %c0_13], %45 {strides = array<i32>} : memref<72x256xf32, #tpu.memory_space<vmem>>, vector<8x256xf32>,
    %c0_14 = arith.constant 0 : index
    %c0_15 = arith.constant 0 : index
    %47 = vector.load %arg3[%c0_14, %c0_15] : memref<8x72xf32, #tpu.memory_space<vmem>>, vector<8x72xf32>
    %c0_16 = arith.constant 0 : index
    %c0_17 = arith.constant 0 : index
    %48 = vector.load %arg15[%c0_16, %c0_17] : memref<72x256xf32, #tpu.memory_space<vmem>>, vector<72x256xf32>
    %cst = arith.constant dense<0.000000e+00> : vector<8x256xf32>
    %49 = tpu.matmul %47, %48, %cst {dimension_numbers = #tpu.dot_dimension_numbers<[1], [0], [0], [1], [0, 0, 1, 1], [], []>} : vector<8x72xf32>, vector<72x256xf32>, vector<8x256xf32> -> vector<8x256xf32>
    %c0_18 = arith.constant 0 : index
    %c0_19 = arith.constant 0 : index
    %50 = vector.load %arg4[%c0_18, %c0_19] : memref<8x1xf32, #tpu.memory_space<vmem>>, vector<8x1xf32>
    %51 = vector.broadcast %50 : vector<8x1xf32> to vector<8x256xf32>
    %52 = arith.addf %49, %51 : vector<8x256xf32>
    %cst_20 = arith.constant 0.000000e+00 : f32
    %53 = vector.broadcast %cst_20 : f32 to vector<8x256xf32>
    %54 = arith.cmpf ogt, %52, %53 : vector<8x256xf32>
    %cst_21 = arith.constant 1.000000e-01 : f32
    %55 = vector.broadcast %cst_21 : f32 to vector<8x256xf32>
    %56 = arith.mulf %55, %52 : vector<8x256xf32>
    %57 = arith.select %54, %52, %56 : vector<8x256xi1>, vector<8x256xf32>
    %c17_i32_22 = arith.constant 17 : i32
    %58 = tpu.dynamic_rotate %57 by %c17_i32_22 dim 1 : vector<8x256xf32>, i32 -> vector<8x256xf32>
    %59 = vector.extract_strided_slice %0 {offsets = [0, 0], sizes = [1, 256], strides = [1, 1]} : vector<9x256xf32> to vector<1x256xf32>
    %60 = vector.broadcast %59 : vector<1x256xf32> to vector<8x256xf32>
    %61 = arith.mulf %58, %60 : vector<8x256xf32>
    %c0_23 = arith.constant 0 : index
    %c0_24 = arith.constant 0 : index
    %62 = vector.load %arg15[%c0_23, %c0_24] : memref<72x256xf32, #tpu.memory_space<vmem>>, vector<8x256xf32>
    tpu.vector_store %arg15[%c0_23, %c0_24], %61 {strides = array<i32>} : memref<72x256xf32, #tpu.memory_space<vmem>>, vector<8x256xf32>,
    %c16_i32_25 = arith.constant 16 : i32
    %63 = tpu.dynamic_rotate %57 by %c16_i32_25 dim 1 : vector<8x256xf32>, i32 -> vector<8x256xf32>
    %64 = vector.extract_strided_slice %0 {offsets = [1, 0], sizes = [1, 256], strides = [1, 1]} : vector<9x256xf32> to vector<1x256xf32>
    %65 = vector.broadcast %64 : vector<1x256xf32> to vector<8x256xf32>
    %66 = arith.mulf %63, %65 : vector<8x256xf32>
    %c8_26 = arith.constant 8 : index
    %c0_27 = arith.constant 0 : index
    %67 = vector.load %arg15[%c8_26, %c0_27] : memref<72x256xf32, #tpu.memory_space<vmem>>, vector<8x256xf32>
    tpu.vector_store %arg15[%c8_26, %c0_27], %66 {strides = array<i32>} : memref<72x256xf32, #tpu.memory_space<vmem>>, vector<8x256xf32>,
    %c15_i32_28 = arith.constant 15 : i32
    %68 = tpu.dynamic_rotate %57 by %c15_i32_28 dim 1 : vector<8x256xf32>, i32 -> vector<8x256xf32>
    %69 = vector.extract_strided_slice %0 {offsets = [2, 0], sizes = [1, 256], strides = [1, 1]} : vector<9x256xf32> to vector<1x256xf32>
    %70 = vector.broadcast %69 : vector<1x256xf32> to vector<8x256xf32>
    %71 = arith.mulf %68, %70 : vector<8x256xf32>
    %c16_29 = arith.constant 16 : index
    %c0_30 = arith.constant 0 : index
    %72 = vector.load %arg15[%c16_29, %c0_30] : memref<72x256xf32, #tpu.memory_space<vmem>>, vector<8x256xf32>
    tpu.vector_store %arg15[%c16_29, %c0_30], %71 {strides = array<i32>} : memref<72x256xf32, #tpu.memory_space<vmem>>, vector<8x256xf32>,
    %c1_i32_31 = arith.constant 1 : i32
    %73 = tpu.dynamic_rotate %57 by %c1_i32_31 dim 1 : vector<8x256xf32>, i32 -> vector<8x256xf32>
    %74 = vector.extract_strided_slice %0 {offsets = [3, 0], sizes = [1, 256], strides = [1, 1]} : vector<9x256xf32> to vector<1x256xf32>
    %75 = vector.broadcast %74 : vector<1x256xf32> to vector<8x256xf32>
    %76 = arith.mulf %73, %75 : vector<8x256xf32>
    %c24_32 = arith.constant 24 : index
    %c0_33 = arith.constant 0 : index
    %77 = vector.load %arg15[%c24_32, %c0_33] : memref<72x256xf32, #tpu.memory_space<vmem>>, vector<8x256xf32>
    tpu.vector_store %arg15[%c24_32, %c0_33], %76 {strides = array<i32>} : memref<72x256xf32, #tpu.memory_space<vmem>>, vector<8x256xf32>,
    %78 = vector.extract_strided_slice %0 {offsets = [4, 0], sizes = [1, 256], strides = [1, 1]} : vector<9x256xf32> to vector<1x256xf32>
    %79 = vector.broadcast %78 : vector<1x256xf32> to vector<8x256xf32>
    %80 = arith.mulf %57, %79 : vector<8x256xf32>
    %c32_34 = arith.constant 32 : index
    %c0_35 = arith.constant 0 : index
    %81 = vector.load %arg15[%c32_34, %c0_35] : memref<72x256xf32, #tpu.memory_space<vmem>>, vector<8x256xf32>
    tpu.vector_store %arg15[%c32_34, %c0_35], %80 {strides = array<i32>} : memref<72x256xf32, #tpu.memory_space<vmem>>, vector<8x256xf32>,
    %c255_i32_36 = arith.constant 255 : i32
    %82 = tpu.dynamic_rotate %57 by %c255_i32_36 dim 1 : vector<8x256xf32>, i32 -> vector<8x256xf32>
    %83 = vector.extract_strided_slice %0 {offsets = [5, 0], sizes = [1, 256], strides = [1, 1]} : vector<9x256xf32> to vector<1x256xf32>
    %84 = vector.broadcast %83 : vector<1x256xf32> to vector<8x256xf32>
    %85 = arith.mulf %82, %84 : vector<8x256xf32>
    %c40_37 = arith.constant 40 : index
    %c0_38 = arith.constant 0 : index
    %86 = vector.load %arg15[%c40_37, %c0_38] : memref<72x256xf32, #tpu.memory_space<vmem>>, vector<8x256xf32>
    tpu.vector_store %arg15[%c40_37, %c0_38], %85 {strides = array<i32>} : memref<72x256xf32, #tpu.memory_space<vmem>>, vector<8x256xf32>,
    %c241_i32_39 = arith.constant 241 : i32
    %87 = tpu.dynamic_rotate %57 by %c241_i32_39 dim 1 : vector<8x256xf32>, i32 -> vector<8x256xf32>
    %88 = vector.extract_strided_slice %0 {offsets = [6, 0], sizes = [1, 256], strides = [1, 1]} : vector<9x256xf32> to vector<1x256xf32>
    %89 = vector.broadcast %88 : vector<1x256xf32> to vector<8x256xf32>
    %90 = arith.mulf %87, %89 : vector<8x256xf32>
    %c48_40 = arith.constant 48 : index
    %c0_41 = arith.constant 0 : index
    %91 = vector.load %arg15[%c48_40, %c0_41] : memref<72x256xf32, #tpu.memory_space<vmem>>, vector<8x256xf32>
    tpu.vector_store %arg15[%c48_40, %c0_41], %90 {strides = array<i32>} : memref<72x256xf32, #tpu.memory_space<vmem>>, vector<8x256xf32>,
    %c240_i32_42 = arith.constant 240 : i32
    %92 = tpu.dynamic_rotate %57 by %c240_i32_42 dim 1 : vector<8x256xf32>, i32 -> vector<8x256xf32>
    %93 = vector.extract_strided_slice %0 {offsets = [7, 0], sizes = [1, 256], strides = [1, 1]} : vector<9x256xf32> to vector<1x256xf32>
    %94 = vector.broadcast %93 : vector<1x256xf32> to vector<8x256xf32>
    %95 = arith.mulf %92, %94 : vector<8x256xf32>
    %c56_43 = arith.constant 56 : index
    %c0_44 = arith.constant 0 : index
    %96 = vector.load %arg15[%c56_43, %c0_44] : memref<72x256xf32, #tpu.memory_space<vmem>>, vector<8x256xf32>
    tpu.vector_store %arg15[%c56_43, %c0_44], %95 {strides = array<i32>} : memref<72x256xf32, #tpu.memory_space<vmem>>, vector<8x256xf32>,
    %c239_i32_45 = arith.constant 239 : i32
    %97 = tpu.dynamic_rotate %57 by %c239_i32_45 dim 1 : vector<8x256xf32>, i32 -> vector<8x256xf32>
    %98 = vector.extract_strided_slice %0 {offsets = [8, 0], sizes = [1, 256], strides = [1, 1]} : vector<9x256xf32> to vector<1x256xf32>
    %99 = vector.broadcast %98 : vector<1x256xf32> to vector<8x256xf32>
    %100 = arith.mulf %97, %99 : vector<8x256xf32>
    %c64_46 = arith.constant 64 : index
    %c0_47 = arith.constant 0 : index
    %101 = vector.load %arg15[%c64_46, %c0_47] : memref<72x256xf32, #tpu.memory_space<vmem>>, vector<8x256xf32>
    tpu.vector_store %arg15[%c64_46, %c0_47], %100 {strides = array<i32>} : memref<72x256xf32, #tpu.memory_space<vmem>>, vector<8x256xf32>,
    %c0_48 = arith.constant 0 : index
    %c0_49 = arith.constant 0 : index
    %102 = vector.load %arg5[%c0_48, %c0_49] : memref<8x72xf32, #tpu.memory_space<vmem>>, vector<8x72xf32>
    %c0_50 = arith.constant 0 : index
    %c0_51 = arith.constant 0 : index
    %103 = vector.load %arg15[%c0_50, %c0_51] : memref<72x256xf32, #tpu.memory_space<vmem>>, vector<72x256xf32>
    %cst_52 = arith.constant dense<0.000000e+00> : vector<8x256xf32>
    %104 = tpu.matmul %102, %103, %cst_52 {dimension_numbers = #tpu.dot_dimension_numbers<[1], [0], [0], [1], [0, 0, 1, 1], [], []>} : vector<8x72xf32>, vector<72x256xf32>, vector<8x256xf32> -> vector<8x256xf32>
    %c0_53 = arith.constant 0 : index
    %c0_54 = arith.constant 0 : index
    %105 = vector.load %arg6[%c0_53, %c0_54] : memref<8x1xf32, #tpu.memory_space<vmem>>, vector<8x1xf32>
    %106 = vector.broadcast %105 : vector<8x1xf32> to vector<8x256xf32>
    %107 = arith.addf %104, %106 : vector<8x256xf32>
    %cst_55 = arith.constant 0.000000e+00 : f32
    %108 = vector.broadcast %cst_55 : f32 to vector<8x256xf32>
    %109 = arith.cmpf ogt, %107, %108 : vector<8x256xf32>
    %cst_56 = arith.constant 1.000000e-01 : f32
    %110 = vector.broadcast %cst_56 : f32 to vector<8x256xf32>
    %111 = arith.mulf %110, %107 : vector<8x256xf32>
    %112 = arith.select %109, %107, %111 : vector<8x256xi1>, vector<8x256xf32>
    %113 = arith.addf %112, %57 : vector<8x256xf32>
    %cst_57 = arith.constant 0.000000e+00 : f32
    %114 = vector.broadcast %cst_57 : f32 to vector<8x256xf32>
    %115 = arith.cmpf ogt, %113, %114 : vector<8x256xf32>
    %cst_58 = arith.constant 1.000000e-01 : f32
    %116 = vector.broadcast %cst_58 : f32 to vector<8x256xf32>
    %117 = arith.mulf %116, %113 : vector<8x256xf32>
    %118 = arith.select %115, %113, %117 : vector<8x256xi1>, vector<8x256xf32>
    %c0_59 = arith.constant 0 : index
    %c0_60 = arith.constant 0 : index
    %c0_61 = arith.constant 0 : index
    %119 = vector.load %arg12[%c0_59, %c0_60, %c0_61] : memref<1x8x256xf32, #tpu.memory_space<vmem>>, vector<1x8x256xf32>
    %120 = vector.shape_cast %119 : vector<1x8x256xf32> to vector<8x256xf32>
    %121 = vector.shape_cast %118 : vector<8x256xf32> to vector<1x8x256xf32>
    tpu.vector_store %arg12[%c0_59, %c0_60, %c0_61], %121 {strides = array<i32>} : memref<1x8x256xf32, #tpu.memory_space<vmem>>, vector<1x8x256xf32>,
    %c0_62 = arith.constant 0 : index
    %c0_63 = arith.constant 0 : index
    %122 = vector.load %arg7[%c0_62, %c0_63] : memref<16x8xf32, #tpu.memory_space<vmem>>, vector<16x8xf32>
    %cst_64 = arith.constant dense<0.000000e+00> : vector<16x256xf32>
    %123 = tpu.matmul %122, %118, %cst_64 {dimension_numbers = #tpu.dot_dimension_numbers<[1], [0], [0], [1], [0, 0, 1, 1], [], []>} : vector<16x8xf32>, vector<8x256xf32>, vector<16x256xf32> -> vector<16x256xf32>
    %c0_65 = arith.constant 0 : index
    %c0_66 = arith.constant 0 : index
    %124 = vector.load %arg8[%c0_65, %c0_66] : memref<16x1xf32, #tpu.memory_space<vmem>>, vector<16x1xf32>
    %125 = vector.broadcast %124 : vector<16x1xf32> to vector<16x256xf32>
    %126 = arith.addf %123, %125 : vector<16x256xf32>
    %cst_67 = arith.constant 0.000000e+00 : f32
    %127 = vector.broadcast %cst_67 : f32 to vector<16x256xf32>
    %128 = arith.cmpf ogt, %126, %127 : vector<16x256xf32>
    %cst_68 = arith.constant 1.000000e-01 : f32
    %129 = vector.broadcast %cst_68 : f32 to vector<16x256xf32>
    %130 = arith.mulf %129, %126 : vector<16x256xf32>
    %131 = arith.select %128, %126, %130 : vector<16x256xi1>, vector<16x256xf32>
    %c0_69 = arith.constant 0 : index
    %c0_70 = arith.constant 0 : index
    %c0_71 = arith.constant 0 : index
    %132 = vector.load %arg13[%c0_69, %c0_70, %c0_71] : memref<1x16x256xf32, #tpu.memory_space<vmem>>, vector<1x16x256xf32>
    %133 = vector.shape_cast %132 : vector<1x16x256xf32> to vector<16x256xf32>
    %134 = vector.shape_cast %131 : vector<16x256xf32> to vector<1x16x256xf32>
    tpu.vector_store %arg13[%c0_69, %c0_70, %c0_71], %134 {strides = array<i32>} : memref<1x16x256xf32, #tpu.memory_space<vmem>>, vector<1x16x256xf32>,
    %c0_72 = arith.constant 0 : index
    %c0_73 = arith.constant 0 : index
    %135 = vector.load %arg15[%c0_72, %c0_73] : memref<72x256xf32, #tpu.memory_space<vmem>>, vector<8x256xf32>
    tpu.vector_store %arg15[%c0_72, %c0_73], %118 {strides = array<i32>} : memref<72x256xf32, #tpu.memory_space<vmem>>, vector<8x256xf32>,
    %c255_i32_74 = arith.constant 255 : i32
    %136 = tpu.dynamic_rotate %118 by %c255_i32_74 dim 1 : vector<8x256xf32>, i32 -> vector<8x256xf32>
    %c8_75 = arith.constant 8 : index
    %c0_76 = arith.constant 0 : index
    %137 = vector.load %arg15[%c8_75, %c0_76] : memref<72x256xf32, #tpu.memory_space<vmem>>, vector<8x256xf32>
    tpu.vector_store %arg15[%c8_75, %c0_76], %136 {strides = array<i32>} : memref<72x256xf32, #tpu.memory_space<vmem>>, vector<8x256xf32>,
    %c240_i32_77 = arith.constant 240 : i32
    %138 = tpu.dynamic_rotate %118 by %c240_i32_77 dim 1 : vector<8x256xf32>, i32 -> vector<8x256xf32>
    %c16_78 = arith.constant 16 : index
    %c0_79 = arith.constant 0 : index
    %139 = vector.load %arg15[%c16_78, %c0_79] : memref<72x256xf32, #tpu.memory_space<vmem>>, vector<8x256xf32>
    tpu.vector_store %arg15[%c16_78, %c0_79], %138 {strides = array<i32>} : memref<72x256xf32, #tpu.memory_space<vmem>>, vector<8x256xf32>,
    %c239_i32_80 = arith.constant 239 : i32
    %140 = tpu.dynamic_rotate %118 by %c239_i32_80 dim 1 : vector<8x256xf32>, i32 -> vector<8x256xf32>
    %c24_81 = arith.constant 24 : index
    %c0_82 = arith.constant 0 : index
    %141 = vector.load %arg15[%c24_81, %c0_82] : memref<72x256xf32, #tpu.memory_space<vmem>>, vector<8x256xf32>
    tpu.vector_store %arg15[%c24_81, %c0_82], %140 {strides = array<i32>} : memref<72x256xf32, #tpu.memory_space<vmem>>, vector<8x256xf32>,
    %c0_83 = arith.constant 0 : index
    %c0_84 = arith.constant 0 : index
    %142 = vector.load %arg9[%c0_83, %c0_84] : memref<16x32xf32, #tpu.memory_space<vmem>>, vector<16x32xf32>
    %c0_85 = arith.constant 0 : index
    %c0_86 = arith.constant 0 : index
    %143 = vector.load %arg15[%c0_85, %c0_86] : memref<72x256xf32, #tpu.memory_space<vmem>>, vector<32x256xf32>
    %cst_87 = arith.constant dense<0.000000e+00> : vector<16x256xf32>
    %144 = tpu.matmul %142, %143, %cst_87 {dimension_numbers = #tpu.dot_dimension_numbers<[1], [0], [0], [1], [0, 0, 1, 1], [], []>} : vector<16x32xf32>, vector<32x256xf32>, vector<16x256xf32> -> vector<16x256xf32>
    %c0_88 = arith.constant 0 : index
    %c0_89 = arith.constant 0 : index
    %145 = vector.load %arg10[%c0_88, %c0_89] : memref<16x1xf32, #tpu.memory_space<vmem>>, vector<16x1xf32>
    %c0_90 = arith.constant 0 : index
    %c0_91 = arith.constant 0 : index
    %146 = vector.load %arg11[%c0_90, %c0_91] : memref<16x8xf32, #tpu.memory_space<vmem>>, vector<16x8xf32>
    %147 = vector.extract_strided_slice %144 {offsets = [0, 0], sizes = [16, 16], strides = [1, 1]} : vector<16x256xf32> to vector<16x16xf32>
    %cst_92 = arith.constant dense<0.000000e+00> : vector<16x8xf32>
    %148 = tpu.matmul %147, %146, %cst_92 {dimension_numbers = #tpu.dot_dimension_numbers<[1], [0], [0], [1], [0, 0, 1, 1], [], []>} : vector<16x16xf32>, vector<16x8xf32>, vector<16x8xf32> -> vector<16x8xf32>
    %149 = vector.broadcast %145 : vector<16x1xf32> to vector<16x8xf32>
    %150 = arith.addf %148, %149 : vector<16x8xf32>
    %cst_93 = arith.constant 0.000000e+00 : f32
    %151 = vector.broadcast %cst_93 : f32 to vector<16x8xf32>
    %152 = arith.cmpf ogt, %150, %151 : vector<16x8xf32>
    %cst_94 = arith.constant 1.000000e-01 : f32
    %153 = vector.broadcast %cst_94 : f32 to vector<16x8xf32>
    %154 = arith.mulf %153, %150 : vector<16x8xf32>
    %155 = arith.select %152, %150, %154 : vector<16x8xi1>, vector<16x8xf32>
    %c0_95 = arith.constant 0 : index
    %c0_96 = arith.constant 0 : index
    %c0_97 = arith.constant 0 : index
    %c0_98 = arith.constant 0 : index
    %156 = vector.load %arg14[%c0_95, %c0_96, %c0_97, %c0_98] : memref<1x16x8x8xf32, #tpu.memory_space<vmem>>, vector<1x16x1x8xf32>
    %157 = vector.shape_cast %156 : vector<1x16x1x8xf32> to vector<16x8xf32>
    %158 = vector.shape_cast %155 : vector<16x8xf32> to vector<1x16x1x8xf32>
    tpu.vector_store %arg14[%c0_95, %c0_96, %c0_97, %c0_98], %158 {strides = array<i32>} : memref<1x16x8x8xf32, #tpu.memory_space<vmem>>, vector<1x16x1x8xf32>,
    %159 = vector.extract_strided_slice %144 {offsets = [0, 32], sizes = [16, 16], strides = [1, 1]} : vector<16x256xf32> to vector<16x16xf32>
    %cst_99 = arith.constant dense<0.000000e+00> : vector<16x8xf32>
    %160 = tpu.matmul %159, %146, %cst_99 {dimension_numbers = #tpu.dot_dimension_numbers<[1], [0], [0], [1], [0, 0, 1, 1], [], []>} : vector<16x16xf32>, vector<16x8xf32>, vector<16x8xf32> -> vector<16x8xf32>
    %161 = vector.broadcast %145 : vector<16x1xf32> to vector<16x8xf32>
    %162 = arith.addf %160, %161 : vector<16x8xf32>
    %cst_100 = arith.constant 0.000000e+00 : f32
    %163 = vector.broadcast %cst_100 : f32 to vector<16x8xf32>
    %164 = arith.cmpf ogt, %162, %163 : vector<16x8xf32>
    %cst_101 = arith.constant 1.000000e-01 : f32
    %165 = vector.broadcast %cst_101 : f32 to vector<16x8xf32>
    %166 = arith.mulf %165, %162 : vector<16x8xf32>
    %167 = arith.select %164, %162, %166 : vector<16x8xi1>, vector<16x8xf32>
    %c0_102 = arith.constant 0 : index
    %c0_103 = arith.constant 0 : index
    %c1 = arith.constant 1 : index
    %c0_104 = arith.constant 0 : index
    %168 = vector.load %arg14[%c0_102, %c0_103, %c1, %c0_104] : memref<1x16x8x8xf32, #tpu.memory_space<vmem>>, vector<1x16x1x8xf32>
    %169 = vector.shape_cast %168 : vector<1x16x1x8xf32> to vector<16x8xf32>
    %170 = vector.shape_cast %167 : vector<16x8xf32> to vector<1x16x1x8xf32>
    tpu.vector_store %arg14[%c0_102, %c0_103, %c1, %c0_104], %170 {strides = array<i32>} : memref<1x16x8x8xf32, #tpu.memory_space<vmem>>, vector<1x16x1x8xf32>,
    %171 = vector.extract_strided_slice %144 {offsets = [0, 64], sizes = [16, 16], strides = [1, 1]} : vector<16x256xf32> to vector<16x16xf32>
    %cst_105 = arith.constant dense<0.000000e+00> : vector<16x8xf32>
    %172 = tpu.matmul %171, %146, %cst_105 {dimension_numbers = #tpu.dot_dimension_numbers<[1], [0], [0], [1], [0, 0, 1, 1], [], []>} : vector<16x16xf32>, vector<16x8xf32>, vector<16x8xf32> -> vector<16x8xf32>
    %173 = vector.broadcast %145 : vector<16x1xf32> to vector<16x8xf32>
    %174 = arith.addf %172, %173 : vector<16x8xf32>
    %cst_106 = arith.constant 0.000000e+00 : f32
    %175 = vector.broadcast %cst_106 : f32 to vector<16x8xf32>
    %176 = arith.cmpf ogt, %174, %175 : vector<16x8xf32>
    %cst_107 = arith.constant 1.000000e-01 : f32
    %177 = vector.broadcast %cst_107 : f32 to vector<16x8xf32>
    %178 = arith.mulf %177, %174 : vector<16x8xf32>
    %179 = arith.select %176, %174, %178 : vector<16x8xi1>, vector<16x8xf32>
    %c0_108 = arith.constant 0 : index
    %c0_109 = arith.constant 0 : index
    %c2 = arith.constant 2 : index
    %c0_110 = arith.constant 0 : index
    %180 = vector.load %arg14[%c0_108, %c0_109, %c2, %c0_110] : memref<1x16x8x8xf32, #tpu.memory_space<vmem>>, vector<1x16x1x8xf32>
    %181 = vector.shape_cast %180 : vector<1x16x1x8xf32> to vector<16x8xf32>
    %182 = vector.shape_cast %179 : vector<16x8xf32> to vector<1x16x1x8xf32>
    tpu.vector_store %arg14[%c0_108, %c0_109, %c2, %c0_110], %182 {strides = array<i32>} : memref<1x16x8x8xf32, #tpu.memory_space<vmem>>, vector<1x16x1x8xf32>,
    %183 = vector.extract_strided_slice %144 {offsets = [0, 96], sizes = [16, 16], strides = [1, 1]} : vector<16x256xf32> to vector<16x16xf32>
    %cst_111 = arith.constant dense<0.000000e+00> : vector<16x8xf32>
    %184 = tpu.matmul %183, %146, %cst_111 {dimension_numbers = #tpu.dot_dimension_numbers<[1], [0], [0], [1], [0, 0, 1, 1], [], []>} : vector<16x16xf32>, vector<16x8xf32>, vector<16x8xf32> -> vector<16x8xf32>
    %185 = vector.broadcast %145 : vector<16x1xf32> to vector<16x8xf32>
    %186 = arith.addf %184, %185 : vector<16x8xf32>
    %cst_112 = arith.constant 0.000000e+00 : f32
    %187 = vector.broadcast %cst_112 : f32 to vector<16x8xf32>
    %188 = arith.cmpf ogt, %186, %187 : vector<16x8xf32>
    %cst_113 = arith.constant 1.000000e-01 : f32
    %189 = vector.broadcast %cst_113 : f32 to vector<16x8xf32>
    %190 = arith.mulf %189, %186 : vector<16x8xf32>
    %191 = arith.select %188, %186, %190 : vector<16x8xi1>, vector<16x8xf32>
    %c0_114 = arith.constant 0 : index
    %c0_115 = arith.constant 0 : index
    %c3 = arith.constant 3 : index
    %c0_116 = arith.constant 0 : index
    %192 = vector.load %arg14[%c0_114, %c0_115, %c3, %c0_116] : memref<1x16x8x8xf32, #tpu.memory_space<vmem>>, vector<1x16x1x8xf32>
    %193 = vector.shape_cast %192 : vector<1x16x1x8xf32> to vector<16x8xf32>
    %194 = vector.shape_cast %191 : vector<16x8xf32> to vector<1x16x1x8xf32>
    tpu.vector_store %arg14[%c0_114, %c0_115, %c3, %c0_116], %194 {strides = array<i32>} : memref<1x16x8x8xf32, #tpu.memory_space<vmem>>, vector<1x16x1x8xf32>,
    %195 = vector.extract_strided_slice %144 {offsets = [0, 128], sizes = [16, 16], strides = [1, 1]} : vector<16x256xf32> to vector<16x16xf32>
    %cst_117 = arith.constant dense<0.000000e+00> : vector<16x8xf32>
    %196 = tpu.matmul %195, %146, %cst_117 {dimension_numbers = #tpu.dot_dimension_numbers<[1], [0], [0], [1], [0, 0, 1, 1], [], []>} : vector<16x16xf32>, vector<16x8xf32>, vector<16x8xf32> -> vector<16x8xf32>
    %197 = vector.broadcast %145 : vector<16x1xf32> to vector<16x8xf32>
    %198 = arith.addf %196, %197 : vector<16x8xf32>
    %cst_118 = arith.constant 0.000000e+00 : f32
    %199 = vector.broadcast %cst_118 : f32 to vector<16x8xf32>
    %200 = arith.cmpf ogt, %198, %199 : vector<16x8xf32>
    %cst_119 = arith.constant 1.000000e-01 : f32
    %201 = vector.broadcast %cst_119 : f32 to vector<16x8xf32>
    %202 = arith.mulf %201, %198 : vector<16x8xf32>
    %203 = arith.select %200, %198, %202 : vector<16x8xi1>, vector<16x8xf32>
    %c0_120 = arith.constant 0 : index
    %c0_121 = arith.constant 0 : index
    %c4 = arith.constant 4 : index
    %c0_122 = arith.constant 0 : index
    %204 = vector.load %arg14[%c0_120, %c0_121, %c4, %c0_122] : memref<1x16x8x8xf32, #tpu.memory_space<vmem>>, vector<1x16x1x8xf32>
    %205 = vector.shape_cast %204 : vector<1x16x1x8xf32> to vector<16x8xf32>
    %206 = vector.shape_cast %203 : vector<16x8xf32> to vector<1x16x1x8xf32>
    tpu.vector_store %arg14[%c0_120, %c0_121, %c4, %c0_122], %206 {strides = array<i32>} : memref<1x16x8x8xf32, #tpu.memory_space<vmem>>, vector<1x16x1x8xf32>,
    %207 = vector.extract_strided_slice %144 {offsets = [0, 160], sizes = [16, 16], strides = [1, 1]} : vector<16x256xf32> to vector<16x16xf32>
    %cst_123 = arith.constant dense<0.000000e+00> : vector<16x8xf32>
    %208 = tpu.matmul %207, %146, %cst_123 {dimension_numbers = #tpu.dot_dimension_numbers<[1], [0], [0], [1], [0, 0, 1, 1], [], []>} : vector<16x16xf32>, vector<16x8xf32>, vector<16x8xf32> -> vector<16x8xf32>
    %209 = vector.broadcast %145 : vector<16x1xf32> to vector<16x8xf32>
    %210 = arith.addf %208, %209 : vector<16x8xf32>
    %cst_124 = arith.constant 0.000000e+00 : f32
    %211 = vector.broadcast %cst_124 : f32 to vector<16x8xf32>
    %212 = arith.cmpf ogt, %210, %211 : vector<16x8xf32>
    %cst_125 = arith.constant 1.000000e-01 : f32
    %213 = vector.broadcast %cst_125 : f32 to vector<16x8xf32>
    %214 = arith.mulf %213, %210 : vector<16x8xf32>
    %215 = arith.select %212, %210, %214 : vector<16x8xi1>, vector<16x8xf32>
    %c0_126 = arith.constant 0 : index
    %c0_127 = arith.constant 0 : index
    %c5 = arith.constant 5 : index
    %c0_128 = arith.constant 0 : index
    %216 = vector.load %arg14[%c0_126, %c0_127, %c5, %c0_128] : memref<1x16x8x8xf32, #tpu.memory_space<vmem>>, vector<1x16x1x8xf32>
    %217 = vector.shape_cast %216 : vector<1x16x1x8xf32> to vector<16x8xf32>
    %218 = vector.shape_cast %215 : vector<16x8xf32> to vector<1x16x1x8xf32>
    tpu.vector_store %arg14[%c0_126, %c0_127, %c5, %c0_128], %218 {strides = array<i32>} : memref<1x16x8x8xf32, #tpu.memory_space<vmem>>, vector<1x16x1x8xf32>,
    %219 = vector.extract_strided_slice %144 {offsets = [0, 192], sizes = [16, 16], strides = [1, 1]} : vector<16x256xf32> to vector<16x16xf32>
    %cst_129 = arith.constant dense<0.000000e+00> : vector<16x8xf32>
    %220 = tpu.matmul %219, %146, %cst_129 {dimension_numbers = #tpu.dot_dimension_numbers<[1], [0], [0], [1], [0, 0, 1, 1], [], []>} : vector<16x16xf32>, vector<16x8xf32>, vector<16x8xf32> -> vector<16x8xf32>
    %221 = vector.broadcast %145 : vector<16x1xf32> to vector<16x8xf32>
    %222 = arith.addf %220, %221 : vector<16x8xf32>
    %cst_130 = arith.constant 0.000000e+00 : f32
    %223 = vector.broadcast %cst_130 : f32 to vector<16x8xf32>
    %224 = arith.cmpf ogt, %222, %223 : vector<16x8xf32>
    %cst_131 = arith.constant 1.000000e-01 : f32
    %225 = vector.broadcast %cst_131 : f32 to vector<16x8xf32>
    %226 = arith.mulf %225, %222 : vector<16x8xf32>
    %227 = arith.select %224, %222, %226 : vector<16x8xi1>, vector<16x8xf32>
    %c0_132 = arith.constant 0 : index
    %c0_133 = arith.constant 0 : index
    %c6 = arith.constant 6 : index
    %c0_134 = arith.constant 0 : index
    %228 = vector.load %arg14[%c0_132, %c0_133, %c6, %c0_134] : memref<1x16x8x8xf32, #tpu.memory_space<vmem>>, vector<1x16x1x8xf32>
    %229 = vector.shape_cast %228 : vector<1x16x1x8xf32> to vector<16x8xf32>
    %230 = vector.shape_cast %227 : vector<16x8xf32> to vector<1x16x1x8xf32>
    tpu.vector_store %arg14[%c0_132, %c0_133, %c6, %c0_134], %230 {strides = array<i32>} : memref<1x16x8x8xf32, #tpu.memory_space<vmem>>, vector<1x16x1x8xf32>,
    %231 = vector.extract_strided_slice %144 {offsets = [0, 224], sizes = [16, 16], strides = [1, 1]} : vector<16x256xf32> to vector<16x16xf32>
    %cst_135 = arith.constant dense<0.000000e+00> : vector<16x8xf32>
    %232 = tpu.matmul %231, %146, %cst_135 {dimension_numbers = #tpu.dot_dimension_numbers<[1], [0], [0], [1], [0, 0, 1, 1], [], []>} : vector<16x16xf32>, vector<16x8xf32>, vector<16x8xf32> -> vector<16x8xf32>
    %233 = vector.broadcast %145 : vector<16x1xf32> to vector<16x8xf32>
    %234 = arith.addf %232, %233 : vector<16x8xf32>
    %cst_136 = arith.constant 0.000000e+00 : f32
    %235 = vector.broadcast %cst_136 : f32 to vector<16x8xf32>
    %236 = arith.cmpf ogt, %234, %235 : vector<16x8xf32>
    %cst_137 = arith.constant 1.000000e-01 : f32
    %237 = vector.broadcast %cst_137 : f32 to vector<16x8xf32>
    %238 = arith.mulf %237, %234 : vector<16x8xf32>
    %239 = arith.select %236, %234, %238 : vector<16x8xi1>, vector<16x8xf32>
    %c0_138 = arith.constant 0 : index
    %c0_139 = arith.constant 0 : index
    %c7 = arith.constant 7 : index
    %c0_140 = arith.constant 0 : index
    %240 = vector.load %arg14[%c0_138, %c0_139, %c7, %c0_140] : memref<1x16x8x8xf32, #tpu.memory_space<vmem>>, vector<1x16x1x8xf32>
    %241 = vector.shape_cast %240 : vector<1x16x1x8xf32> to vector<16x8xf32>
    %242 = vector.shape_cast %239 : vector<16x8xf32> to vector<1x16x1x8xf32>
    tpu.vector_store %arg14[%c0_138, %c0_139, %c7, %c0_140], %242 {strides = array<i32>} : memref<1x16x8x8xf32, #tpu.memory_space<vmem>>, vector<1x16x1x8xf32>,
    return
  }
  func.func @transform_0(%arg0: i32) -> (i32, i32, i32) {
    %c0_i32 = arith.constant 0 : i32
    %c0_i32_0 = arith.constant 0 : i32
    %c0_i32_1 = arith.constant 0 : i32
    return %arg0, %c0_i32, %c0_i32_0 : i32, i32, i32
  }
  func.func @transform_1(%arg0: i32) -> (i32, i32) {
    %c0_i32 = arith.constant 0 : i32
    %c0_i32_0 = arith.constant 0 : i32
    %c0_i32_1 = arith.constant 0 : i32
    return %c0_i32, %c0_i32_0 : i32, i32
  }
  func.func @transform_2(%arg0: i32) -> (i32, i32) {
    %c0_i32 = arith.constant 0 : i32
    %c0_i32_0 = arith.constant 0 : i32
    %c0_i32_1 = arith.constant 0 : i32
    return %c0_i32, %c0_i32_0 : i32, i32
  }
  func.func @transform_3(%arg0: i32) -> (i32, i32) {
    %c0_i32 = arith.constant 0 : i32
    %c0_i32_0 = arith.constant 0 : i32
    %c0_i32_1 = arith.constant 0 : i32
    return %c0_i32, %c0_i32_0 : i32, i32
  }
  func.func @transform_4(%arg0: i32) -> (i32, i32) {
    %c0_i32 = arith.constant 0 : i32
    %c0_i32_0 = arith.constant 0 : i32
    %c0_i32_1 = arith.constant 0 : i32
    return %c0_i32, %c0_i32_0 : i32, i32
  }
  func.func @transform_5(%arg0: i32) -> (i32, i32) {
    %c0_i32 = arith.constant 0 : i32
    %c0_i32_0 = arith.constant 0 : i32
    %c0_i32_1 = arith.constant 0 : i32
    return %c0_i32, %c0_i32_0 : i32, i32
  }
  func.func @transform_6(%arg0: i32) -> (i32, i32) {
    %c0_i32 = arith.constant 0 : i32
    %c0_i32_0 = arith.constant 0 : i32
    %c0_i32_1 = arith.constant 0 : i32
    return %c0_i32, %c0_i32_0 : i32, i32
  }
  func.func @transform_7(%arg0: i32) -> (i32, i32) {
    %c0_i32 = arith.constant 0 : i32
    %c0_i32_0 = arith.constant 0 : i32
    %c0_i32_1 = arith.constant 0 : i32
    return %c0_i32, %c0_i32_0 : i32, i32
  }
  func.func @transform_8(%arg0: i32) -> (i32, i32) {
    %c0_i32 = arith.constant 0 : i32
    %c0_i32_0 = arith.constant 0 : i32
    %c0_i32_1 = arith.constant 0 : i32
    return %c0_i32, %c0_i32_0 : i32, i32
  }
  func.func @transform_9(%arg0: i32) -> (i32, i32) {
    %c0_i32 = arith.constant 0 : i32
    %c0_i32_0 = arith.constant 0 : i32
    %c0_i32_1 = arith.constant 0 : i32
    return %c0_i32, %c0_i32_0 : i32, i32
  }
  func.func @transform_10(%arg0: i32) -> (i32, i32) {
    %c0_i32 = arith.constant 0 : i32
    %c0_i32_0 = arith.constant 0 : i32
    %c0_i32_1 = arith.constant 0 : i32
    return %c0_i32, %c0_i32_0 : i32, i32
  }
  func.func @transform_11(%arg0: i32) -> (i32, i32, i32) {
    %c0_i32 = arith.constant 0 : i32
    %c0_i32_0 = arith.constant 0 : i32
    %c0_i32_1 = arith.constant 0 : i32
    return %arg0, %c0_i32, %c0_i32_0 : i32, i32, i32
  }
  func.func @transform_12(%arg0: i32) -> (i32, i32, i32) {
    %c0_i32 = arith.constant 0 : i32
    %c0_i32_0 = arith.constant 0 : i32
    %c0_i32_1 = arith.constant 0 : i32
    return %arg0, %c0_i32, %c0_i32_0 : i32, i32, i32
  }
  func.func @transform_13(%arg0: i32) -> (i32, i32, i32, i32) {
    %c0_i32 = arith.constant 0 : i32
    %c0_i32_0 = arith.constant 0 : i32
    %c0_i32_1 = arith.constant 0 : i32
    %c0_i32_2 = arith.constant 0 : i32
    return %arg0, %c0_i32, %c0_i32_0, %c0_i32_1 : i32, i32, i32, i32
  }
}

</mosaic_0001>

<llo_original>
// kernel: tpu_custom_call.1
$region0: #{tpu_custom_call.1}
  #allocation0 [shape = 'u32[]', space=smem, size = 0x4, offset = 0x4, fixed_abs, tag = 'smem constant byte address 0x4 - core index']
  #allocation1 [shape = 'u32[72,128]{1,0:T(1,128)}', space=vmem, size = 0x9000, scoped, tag = 'internal scratch']
  #allocation2 [shape = 'f32[72,256]{1,0:T(8,128)}', space=vmem, size = 0x12000, scoped, tag = 'scratch operand']
  %s0 = inlined_call_operand.vmem [shape: f32[2,8,256], index: 0, kind: input, shape index: {}]
  %s1 = inlined_call_operand.vmem [shape: f32[9,256], index: 1, kind: input, shape index: {}]
  %s2 = inlined_call_operand.hbm [shape: f32[8,72], index: 2, kind: input, shape index: {}]
  %s3 = inlined_call_operand.vmem [shape: f32[8,1], index: 3, kind: input, shape index: {}]
  %s4 = inlined_call_operand.hbm [shape: f32[8,72], index: 4, kind: input, shape index: {}]
  %s5 = inlined_call_operand.vmem [shape: f32[8,1], index: 5, kind: input, shape index: {}]
  %s6 = inlined_call_operand.vmem [shape: f32[16,8], index: 6, kind: input, shape index: {}]
  %s7 = inlined_call_operand.vmem [shape: f32[16,1], index: 7, kind: input, shape index: {}]
  %s8 = inlined_call_operand.vmem [shape: f32[16,32], index: 8, kind: input, shape index: {}]
  %s9 = inlined_call_operand.vmem [shape: f32[16,1], index: 9, kind: input, shape index: {}]
  %s10 = inlined_call_operand.vmem [shape: f32[16,8], index: 10, kind: input, shape index: {}]
  %s11 = inlined_call_operand.hbm [shape: f32[2,8,256], index: 11, kind: output, shape index: {0}]
  %s12 = inlined_call_operand.hbm [shape: f32[2,16,256], index: 12, kind: output, shape index: {1}]
  %s13 = inlined_call_operand.vmem [shape: f32[2,16,8,8], index: 13, kind: output, shape index: {2}]
  %14 = xla_tuple %s11, %s12, %s13
  %s15 = sld [smem:[#allocation0]]
  $region101: #{tpu_custom_call.1} parent=0
    _
  %s17 = ssub.s32 1, %s15
  %s18 = scalar_select 0, %s17, %s15
  $region1: #{tpu_custom_call.1} parent=0
    #allocation3 [shape = 'u8[4096]{0}', space=vmem, size = 0x1000, scoped, tag = 'input window, operand 2, single buffered']
    #allocation4 [shape = 's32[2]{0}', space=sflag, size = 0x8, scoped, tag = 'scoped memory for tpu_custom_call.1']
    #allocation5 [shape = 's32[2]{0}', space=sflag, size = 0x8, scoped, tag = 'scoped memory for tpu_custom_call.1']
    #allocation6 [shape = 'u8[4096]{0}', space=vmem, size = 0x1000, scoped, tag = 'input window, operand 4, single buffered']
    #allocation7 [shape = 's32[1]{0}', space=sflag, size = 0x4, scoped, tag = 'scoped memory for tpu_custom_call.1']
    #allocation8 [shape = 'u8[16384]{0}', space=vmem, size = 0x4000, scoped, tag = 'output window, operand 0']
    #allocation9 [shape = 'u8[32768]{0}', space=vmem, size = 0x8000, scoped, tag = 'output window, operand 1']
    #allocation10 [shape = 's32[2]{0}', space=sflag, size = 0x8, scoped, tag = 'scoped memory for tpu_custom_call.1']
    %19 = vsyncpa [#allocation4], 0
    %20 = vsyncpa [#allocation7], 0
    %21 = vsyncpa [#allocation5], 0
    %s22 = scalar_lea.sflag [#allocation5], 1
    %23 = vsyncpa %s22, 0
    %24 = vsyncpa [#allocation10], 0
    %s25 = scalar_lea.sflag [#allocation10], 1
    %26 = vsyncpa %s25, 0
    loop: start=0, step=1, limit=4
    $region2: #{tpu_custom_call.1} parent=1 // loop_pre_header
      _
    $region3: #{tpu_custom_call.1} parent=1 // loop_header
      %s28 = sphi 0, %s32
      %p29 = scmp.ge.s32.totalorder %s28, 4
      %s38 = sphi 0, %s40
      %s41 = sphi 0, %s38
      %s42 = sphi 0, %s41
      %s58 = sphi 0, %s42
      %s62 = sphi 0, %s62
      %s64 = sphi 0, %s62
      %s65 = sphi 0, %s64
      %s79 = sphi 0, %s65
      %s83 = sphi 0, %s83
      %s85 = sphi 0, %s83
      %s86 = sphi 0, %s85
      %s100 = sphi 0, %s86
      %s104 = sphi 0, %s104
      %s106 = sphi 0, %s104
      %s107 = sphi 0, %s106
      %s121 = sphi 0, %s107
      %s125 = sphi 0, %s125
      %s127 = sphi 0, %s125
      %s128 = sphi 0, %s127
      %s142 = sphi 0, %s128
      %s146 = sphi 0, %s146
      %s148 = sphi 0, %s146
      %s149 = sphi 0, %s148
      %s163 = sphi 0, %s149
      %s167 = sphi 0, %s167
      %s169 = sphi 0, %s167
      %s170 = sphi 0, %s169
      %s184 = sphi 0, %s170
      %s188 = sphi 0, %s188
      %s190 = sphi 0, %s188
      %s191 = sphi 0, %s190
      %s205 = sphi 0, %s191
      %s209 = sphi 0, %s209
      %s211 = sphi 0, %s209
      %s212 = sphi 0, %s211
      %s226 = sphi 0, %s212
      %s230 = sphi 0, %s230
      %s232 = sphi 0, %s230
      %s233 = sphi 0, %s232
      %s247 = sphi 0, %s233
      %s251 = sphi 0, %s251
      %s253 = sphi 0, %s251
      %s254 = sphi 0, %s253
      %s268 = sphi 0, %s254
      %s274 = sphi 0, %s276
      %s277 = sphi 0, %s274
      %s278 = sphi 0, %s277
      %s294 = sphi 0, %s278
      %s300 = sphi 0, %s302
      %s303 = sphi 0, %s300
      %s304 = sphi 0, %s303
      %s320 = sphi 0, %s304
      %s326 = sphi 0, %s328
      %s329 = sphi 0, %s326
      %s330 = sphi 0, %s329
      %s346 = sphi 0, %s330
    $region4: #{tpu_custom_call.1} parent=1 // loop_header_branch
      %31 = sbr.rel (%p29) target = $region8
    $region5: #{tpu_custom_call.1} parent=1 // loop_body
      %s33 = ssub.s32 %s28, 1
      %s34 = ssub.s32 %s28, 2
      %s35 = sadd.s32 %s28, 1
      %s36 = ssub.s32 %s28, %s35
      %p37 = scmp.eq.s32.totalorder %s36, 0
      %s39 = sadd.s32 %s38, 1
      %s40 = scalar_select %p37, %s38, %s39
      %p43 = pneg %p37
      %p44 = scmp.eq.s32.totalorder %s28, 1
      %p45 = por %p43, %p44
      %p46 = scmp.ne.s32.totalorder %s38, %s41
      %p47 = scmp.eq.s32.totalorder %s28, 0
      %p48 = por %p46, %p47
      %p49 = scmp.ne.s32.totalorder %s38, %s41
      %p50 = scmp.eq.s32.totalorder %s33, 1
      %p51 = por %p49, %p50
      %p52 = scmp.ne.s32.totalorder %s41, %s42
      %p53 = scmp.eq.s32.totalorder %s33, 0
      %p54 = por %p52, %p53
      %p55 = scmp.ne.s32.totalorder %s41, %s42
      %p56 = scmp.eq.s32.totalorder %s34, 1
      %p57 = por %p55, %p56
      %p59 = scmp.ne.s32.totalorder %s42, %s58
      %p60 = scmp.eq.s32.totalorder %s34, 0
      %p61 = por %p59, %p60
      %s63 = sadd.s32 %s62, 1
      %p66 = scmp.eq.s32.totalorder %s28, 1
      %p67 = scmp.ne.s32.totalorder %s62, %s64
      %p68 = scmp.eq.s32.totalorder %s28, 0
      %p69 = por %p67, %p68
      %p70 = scmp.ne.s32.totalorder %s62, %s64
      %p71 = scmp.eq.s32.totalorder %s33, 1
      %p72 = por %p70, %p71
      %p73 = scmp.ne.s32.totalorder %s64, %s65
      %p74 = scmp.eq.s32.totalorder %s33, 0
      %p75 = por %p73, %p74
      %p76 = scmp.ne.s32.totalorder %s64, %s65
      %p77 = scmp.eq.s32.totalorder %s34, 1
      %p78 = por %p76, %p77
      %p80 = scmp.ne.s32.totalorder %s65, %s79
      %p81 = scmp.eq.s32.totalorder %s34, 0
      %p82 = por %p80, %p81
      %s84 = sadd.s32 %s83, 1
      %p87 = scmp.eq.s32.totalorder %s28, 1
      %p88 = scmp.ne.s32.totalorder %s83, %s85
      %p89 = scmp.eq.s32.totalorder %s28, 0
      %p90 = por %p88, %p89
      %p91 = scmp.ne.s32.totalorder %s83, %s85
      %p92 = scmp.eq.s32.totalorder %s33, 1
      %p93 = por %p91, %p92
      %p94 = scmp.ne.s32.totalorder %s85, %s86
      %p95 = scmp.eq.s32.totalorder %s33, 0
      %p96 = por %p94, %p95
      %p97 = scmp.ne.s32.totalorder %s85, %s86
      %p98 = scmp.eq.s32.totalorder %s34, 1
      %p99 = por %p97, %p98
      %p101 = scmp.ne.s32.totalorder %s86, %s100
      %p102 = scmp.eq.s32.totalorder %s34, 0
      %p103 = por %p101, %p102
      %s105 = sadd.s32 %s104, 1
      %p108 = scmp.eq.s32.totalorder %s28, 1
      %p109 = scmp.ne.s32.totalorder %s104, %s106
      %p110 = scmp.eq.s32.totalorder %s28, 0
      %p111 = por %p109, %p110
      %p112 = scmp.ne.s32.totalorder %s104, %s106
      %p113 = scmp.eq.s32.totalorder %s33, 1
      %p114 = por %p112, %p113
      %p115 = scmp.ne.s32.totalorder %s106, %s107
      %p116 = scmp.eq.s32.totalorder %s33, 0
      %p117 = por %p115, %p116
      %p118 = scmp.ne.s32.totalorder %s106, %s107
      %p119 = scmp.eq.s32.totalorder %s34, 1
      %p120 = por %p118, %p119
      %p122 = scmp.ne.s32.totalorder %s107, %s121
      %p123 = scmp.eq.s32.totalorder %s34, 0
      %p124 = por %p122, %p123
      %s126 = sadd.s32 %s125, 1
      %p129 = scmp.eq.s32.totalorder %s28, 1
      %p130 = scmp.ne.s32.totalorder %s125, %s127
      %p131 = scmp.eq.s32.totalorder %s28, 0
      %p132 = por %p130, %p131
      %p133 = scmp.ne.s32.totalorder %s125, %s127
      %p134 = scmp.eq.s32.totalorder %s33, 1
      %p135 = por %p133, %p134
      %p136 = scmp.ne.s32.totalorder %s127, %s128
      %p137 = scmp.eq.s32.totalorder %s33, 0
      %p138 = por %p136, %p137
      %p139 = scmp.ne.s32.totalorder %s127, %s128
      %p140 = scmp.eq.s32.totalorder %s34, 1
      %p141 = por %p139, %p140
      %p143 = scmp.ne.s32.totalorder %s128, %s142
      %p144 = scmp.eq.s32.totalorder %s34, 0
      %p145 = por %p143, %p144
      %s147 = sadd.s32 %s146, 1
      %p150 = scmp.eq.s32.totalorder %s28, 1
      %p151 = scmp.ne.s32.totalorder %s146, %s148
      %p152 = scmp.eq.s32.totalorder %s28, 0
      %p153 = por %p151, %p152
      %p154 = scmp.ne.s32.totalorder %s146, %s148
      %p155 = scmp.eq.s32.totalorder %s33, 1
      %p156 = por %p154, %p155
      %p157 = scmp.ne.s32.totalorder %s148, %s149
      %p158 = scmp.eq.s32.totalorder %s33, 0
      %p159 = por %p157, %p158
      %p160 = scmp.ne.s32.totalorder %s148, %s149
      %p161 = scmp.eq.s32.totalorder %s34, 1
      %p162 = por %p160, %p161
      %p164 = scmp.ne.s32.totalorder %s149, %s163
      %p165 = scmp.eq.s32.totalorder %s34, 0
      %p166 = por %p164, %p165
      %s168 = sadd.s32 %s167, 1
      %p171 = scmp.eq.s32.totalorder %s28, 1
      %p172 = scmp.ne.s32.totalorder %s167, %s169
      %p173 = scmp.eq.s32.totalorder %s28, 0
      %p174 = por %p172, %p173
      %p175 = scmp.ne.s32.totalorder %s167, %s169
      %p176 = scmp.eq.s32.totalorder %s33, 1
      %p177 = por %p175, %p176
      %p178 = scmp.ne.s32.totalorder %s169, %s170
      %p179 = scmp.eq.s32.totalorder %s33, 0
      %p180 = por %p178, %p179
      %p181 = scmp.ne.s32.totalorder %s169, %s170
      %p182 = scmp.eq.s32.totalorder %s34, 1
      %p183 = por %p181, %p182
      %p185 = scmp.ne.s32.totalorder %s170, %s184
      %p186 = scmp.eq.s32.totalorder %s34, 0
      %p187 = por %p185, %p186
      %s189 = sadd.s32 %s188, 1
      %p192 = scmp.eq.s32.totalorder %s28, 1
      %p193 = scmp.ne.s32.totalorder %s188, %s190
      %p194 = scmp.eq.s32.totalorder %s28, 0
      %p195 = por %p193, %p194
      %p196 = scmp.ne.s32.totalorder %s188, %s190
      %p197 = scmp.eq.s32.totalorder %s33, 1
      %p198 = por %p196, %p197
      %p199 = scmp.ne.s32.totalorder %s190, %s191
      %p200 = scmp.eq.s32.totalorder %s33, 0
      %p201 = por %p199, %p200
      %p202 = scmp.ne.s32.totalorder %s190, %s191
      %p203 = scmp.eq.s32.totalorder %s34, 1
      %p204 = por %p202, %p203
      %p206 = scmp.ne.s32.totalorder %s191, %s205
      %p207 = scmp.eq.s32.totalorder %s34, 0
      %p208 = por %p206, %p207
      %s210 = sadd.s32 %s209, 1
      %p213 = scmp.eq.s32.totalorder %s28, 1
      %p214 = scmp.ne.s32.totalorder %s209, %s211
      %p215 = scmp.eq.s32.totalorder %s28, 0
      %p216 = por %p214, %p215
      %p217 = scmp.ne.s32.totalorder %s209, %s211
      %p218 = scmp.eq.s32.totalorder %s33, 1
      %p219 = por %p217, %p218
      %p220 = scmp.ne.s32.totalorder %s211, %s212
      %p221 = scmp.eq.s32.totalorder %s33, 0
      %p222 = por %p220, %p221
      %p223 = scmp.ne.s32.totalorder %s211, %s212
      %p224 = scmp.eq.s32.totalorder %s34, 1
      %p225 = por %p223, %p224
      %p227 = scmp.ne.s32.totalorder %s212, %s226
      %p228 = scmp.eq.s32.totalorder %s34, 0
      %p229 = por %p227, %p228
      %s231 = sadd.s32 %s230, 1
      %p234 = scmp.eq.s32.totalorder %s28, 1
      %p235 = scmp.ne.s32.totalorder %s230, %s232
      %p236 = scmp.eq.s32.totalorder %s28, 0
      %p237 = por %p235, %p236
      %p238 = scmp.ne.s32.totalorder %s230, %s232
      %p239 = scmp.eq.s32.totalorder %s33, 1
      %p240 = por %p238, %p239
      %p241 = scmp.ne.s32.totalorder %s232, %s233
      %p242 = scmp.eq.s32.totalorder %s33, 0
      %p243 = por %p241, %p242
      %p244 = scmp.ne.s32.totalorder %s232, %s233
      %p245 = scmp.eq.s32.totalorder %s34, 1
      %p246 = por %p244, %p245
      %p248 = scmp.ne.s32.totalorder %s233, %s247
      %p249 = scmp.eq.s32.totalorder %s34, 0
      %p250 = por %p248, %p249
      %s252 = sadd.s32 %s251, 1
      %p255 = scmp.eq.s32.totalorder %s28, 1
      %p256 = scmp.ne.s32.totalorder %s251, %s253
      %p257 = scmp.eq.s32.totalorder %s28, 0
      %p258 = por %p256, %p257
      %p259 = scmp.ne.s32.totalorder %s251, %s253
      %p260 = scmp.eq.s32.totalorder %s33, 1
      %p261 = por %p259, %p260
      %p262 = scmp.ne.s32.totalorder %s253, %s254
      %p263 = scmp.eq.s32.totalorder %s33, 0
      %p264 = por %p262, %p263
      %p265 = scmp.ne.s32.totalorder %s253, %s254
      %p266 = scmp.eq.s32.totalorder %s34, 1
      %p267 = por %p265, %p266
      %p269 = scmp.ne.s32.totalorder %s254, %s268
      %p270 = scmp.eq.s32.totalorder %s34, 0
      %p271 = por %p269, %p270
      %s272 = ssub.s32 %s28, %s35
      %p273 = scmp.eq.s32.totalorder %s272, 0
      %s275 = sadd.s32 %s274, 1
      %s276 = scalar_select %p273, %s274, %s275
      %p279 = pneg %p273
      %p280 = scmp.eq.s32.totalorder %s28, 1
      %p281 = por %p279, %p280
      %p282 = scmp.ne.s32.totalorder %s274, %s277
      %p283 = scmp.eq.s32.totalorder %s28, 0
      %p284 = por %p282, %p283
      %p285 = scmp.ne.s32.totalorder %s274, %s277
      %p286 = scmp.eq.s32.totalorder %s33, 1
      %p287 = por %p285, %p286
      %p288 = scmp.ne.s32.totalorder %s277, %s278
      %p289 = scmp.eq.s32.totalorder %s33, 0
      %p290 = por %p288, %p289
      %p291 = scmp.ne.s32.totalorder %s277, %s278
      %p292 = scmp.eq.s32.totalorder %s34, 1
      %p293 = por %p291, %p292
      %p295 = scmp.ne.s32.totalorder %s278, %s294
      %p296 = scmp.eq.s32.totalorder %s34, 0
      %p297 = por %p295, %p296
      %s298 = ssub.s32 %s28, %s35
      %p299 = scmp.eq.s32.totalorder %s298, 0
      %s301 = sadd.s32 %s300, 1
      %s302 = scalar_select %p299, %s300, %s301
      %p305 = pneg %p299
      %p306 = scmp.eq.s32.totalorder %s28, 1
      %p307 = por %p305, %p306
      %p308 = scmp.ne.s32.totalorder %s300, %s303
      %p309 = scmp.eq.s32.totalorder %s28, 0
      %p310 = por %p308, %p309
      %p311 = scmp.ne.s32.totalorder %s300, %s303
      %p312 = scmp.eq.s32.totalorder %s33, 1
      %p313 = por %p311, %p312
      %p314 = scmp.ne.s32.totalorder %s303, %s304
      %p315 = scmp.eq.s32.totalorder %s33, 0
      %p316 = por %p314, %p315
      %p317 = scmp.ne.s32.totalorder %s303, %s304
      %p318 = scmp.eq.s32.totalorder %s34, 1
      %p319 = por %p317, %p318
      %p321 = scmp.ne.s32.totalorder %s304, %s320
      %p322 = scmp.eq.s32.totalorder %s34, 0
      %p323 = por %p321, %p322
      %s324 = ssub.s32 %s28, %s35
      %p325 = scmp.eq.s32.totalorder %s324, 0
      %s327 = sadd.s32 %s326, 1
      %s328 = scalar_select %p325, %s326, %s327
      %p331 = pneg %p325
      %p332 = scmp.eq.s32.totalorder %s28, 1
      %p333 = por %p331, %p332
      %p334 = scmp.ne.s32.totalorder %s326, %s329
      %p335 = scmp.eq.s32.totalorder %s28, 0
      %p336 = por %p334, %p335
      %p337 = scmp.ne.s32.totalorder %s326, %s329
      %p338 = scmp.eq.s32.totalorder %s33, 1
      %p339 = por %p337, %p338
      %p340 = scmp.ne.s32.totalorder %s329, %s330
      %p341 = scmp.eq.s32.totalorder %s33, 0
      %p342 = por %p340, %p341
      %p343 = scmp.ne.s32.totalorder %s329, %s330
      %p344 = scmp.eq.s32.totalorder %s34, 1
      %p345 = por %p343, %p344
      %p347 = scmp.ne.s32.totalorder %s330, %s346
      %p348 = scmp.eq.s32.totalorder %s34, 0
      %p349 = por %p347, %p348
      %p350 = scmp.le.s32.totalorder 1, %s28
      %p351 = scmp.lt.s32.totalorder %s28, 3
      %p352 = pnand %p350, %p351
      %p353 = pneg %p352
      // Predicated region
      $region9: #{tpu_custom_call.1} parent=5 // pred_check
        _
      $region10: #{tpu_custom_call.1} parent=5 // pred_check_branch
        %355 = sbr.rel (%p352) target = $region12
      $region11: #{tpu_custom_call.1} parent=5 // pred_region
        %s356 = ssub.s32 %s28, 1
        // Predicated region
        $region13: #{tpu_custom_call.1} parent=11 // pred_check
          %p357 = pneg %p75
        $region14: #{tpu_custom_call.1} parent=11 // pred_check_branch
          %359 = sbr.rel (%p357) target = $region16
        $region15: #{tpu_custom_call.1} parent=11 // pred_region
          _
        $region16: #{tpu_custom_call.1} parent=11 // pred_fallthru
          _
        // Predicated region
        $region17: #{tpu_custom_call.1} parent=11 // pred_check
          %p360 = pneg %p96
        $region18: #{tpu_custom_call.1} parent=11 // pred_check_branch
          %362 = sbr.rel (%p360) target = $region20
        $region19: #{tpu_custom_call.1} parent=11 // pred_region
          %364 = vsyncadd [#allocation4], 0
          %s366 = sshll.u32 %s2, 4
          %s367 = int_to_ptr.hbm [resolvable:$true] %s366
          %s368 = sshll.u32 [#allocation3], 4
          %s369 = int_to_ptr.vmem [resolvable:$true] %s368
          %371 = dma.hbm_to_vmem [thread:$0]  %s367, 128, %s369, [#allocation4]
        $region20: #{tpu_custom_call.1} parent=11 // pred_fallthru
          _
        // Predicated region
        $region21: #{tpu_custom_call.1} parent=11 // pred_check
          %p372 = pneg %p117
        $region22: #{tpu_custom_call.1} parent=11 // pred_check_branch
          %374 = sbr.rel (%p372) target = $region24
        $region23: #{tpu_custom_call.1} parent=11 // pred_region
          _
        $region24: #{tpu_custom_call.1} parent=11 // pred_fallthru
          _
        // Predicated region
        $region25: #{tpu_custom_call.1} parent=11 // pred_check
          %p375 = pneg %p138
        $region26: #{tpu_custom_call.1} parent=11 // pred_check_branch
          %377 = sbr.rel (%p375) target = $region28
        $region27: #{tpu_custom_call.1} parent=11 // pred_region
          %379 = vsyncadd [#allocation7], 0
          %s381 = sshll.u32 %s4, 4
          %s382 = int_to_ptr.hbm [resolvable:$true] %s381
          %s383 = sshll.u32 [#allocation6], 4
          %s384 = int_to_ptr.vmem [resolvable:$true] %s383
          %386 = dma.hbm_to_vmem [thread:$0]  %s382, 128, %s384, [#allocation7]
        $region28: #{tpu_custom_call.1} parent=11 // pred_fallthru
          _
        // Predicated region
        $region29: #{tpu_custom_call.1} parent=11 // pred_check
          %p387 = pneg %p159
        $region30: #{tpu_custom_call.1} parent=11 // pred_check_branch
          %389 = sbr.rel (%p387) target = $region32
        $region31: #{tpu_custom_call.1} parent=11 // pred_region
          _
        $region32: #{tpu_custom_call.1} parent=11 // pred_fallthru
          _
        // Predicated region
        $region33: #{tpu_custom_call.1} parent=11 // pred_check
          %p390 = pneg %p180
        $region34: #{tpu_custom_call.1} parent=11 // pred_check_branch
          %392 = sbr.rel (%p390) target = $region36
        $region35: #{tpu_custom_call.1} parent=11 // pred_region
          _
        $region36: #{tpu_custom_call.1} parent=11 // pred_fallthru
          _
        // Predicated region
        $region37: #{tpu_custom_call.1} parent=11 // pred_check
          %p393 = pneg %p201
        $region38: #{tpu_custom_call.1} parent=11 // pred_check_branch
          %395 = sbr.rel (%p393) target = $region40
        $region39: #{tpu_custom_call.1} parent=11 // pred_region
          _
        $region40: #{tpu_custom_call.1} parent=11 // pred_fallthru
          _
        // Predicated region
        $region41: #{tpu_custom_call.1} parent=11 // pred_check
          %p396 = pneg %p222
        $region42: #{tpu_custom_call.1} parent=11 // pred_check_branch
          %398 = sbr.rel (%p396) target = $region44
        $region43: #{tpu_custom_call.1} parent=11 // pred_region
          _
        $region44: #{tpu_custom_call.1} parent=11 // pred_fallthru
          _
        // Predicated region
        $region45: #{tpu_custom_call.1} parent=11 // pred_check
          %p399 = pneg %p243
        $region46: #{tpu_custom_call.1} parent=11 // pred_check_branch
          %401 = sbr.rel (%p399) target = $region48
        $region47: #{tpu_custom_call.1} parent=11 // pred_region
          _
        $region48: #{tpu_custom_call.1} parent=11 // pred_fallthru
          _
        // Predicated region
        $region49: #{tpu_custom_call.1} parent=11 // pred_check
          %p402 = pneg %p264
        $region50: #{tpu_custom_call.1} parent=11 // pred_check_branch
          %404 = sbr.rel (%p402) target = $region52
        $region51: #{tpu_custom_call.1} parent=11 // pred_region
          _
        $region52: #{tpu_custom_call.1} parent=11 // pred_fallthru
          _
      $region12: #{tpu_custom_call.1} parent=5 // pred_fallthru
        _
      %p405 = scmp.lt.s32.totalorder %s28, 2
      // Predicated region
      $region53: #{tpu_custom_call.1} parent=5 // pred_check
        %p406 = pneg %p405
      $region54: #{tpu_custom_call.1} parent=5 // pred_check_branch
        %408 = sbr.rel (%p406) target = $region56
      $region55: #{tpu_custom_call.1} parent=5 // pred_region
        // Predicated region
        $region57: #{tpu_custom_call.1} parent=55 // pred_check
          %p409 = pneg %p48
        $region58: #{tpu_custom_call.1} parent=55 // pred_check_branch
          %411 = sbr.rel (%p409) target = $region60
        $region59: #{tpu_custom_call.1} parent=55 // pred_region
          %p412 = scmp.lt.s32.totalorder %s28, 1
          %s413 = scalar_select %p412, %s28, 1
          %s414 = smul.addr %s413, 2
          %s415 = smul.addr %s414, 8
          %s416 = scalar_lea.vmem %s0, %s415
        $region60: #{tpu_custom_call.1} parent=55 // pred_fallthru
          _
      $region56: #{tpu_custom_call.1} parent=5 // pred_fallthru
        _
      %p417 = scmp.le.s32.totalorder 1, %s28
      %p418 = scmp.lt.s32.totalorder %s28, 3
      %p419 = pnand %p417, %p418
      %p420 = pneg %p419
      // Predicated region
      $region61: #{tpu_custom_call.1} parent=5 // pred_check
        _
      $region62: #{tpu_custom_call.1} parent=5 // pred_check_branch
        %422 = sbr.rel (%p419) target = $region64
      $region63: #{tpu_custom_call.1} parent=5 // pred_region
        %s423 = ssub.s32 %s28, 1
        // Predicated region
        $region65: #{tpu_custom_call.1} parent=63 // pred_check
          %p424 = pneg %p96
        $region66: #{tpu_custom_call.1} parent=63 // pred_check_branch
          %426 = sbr.rel (%p424) target = $region68
        $region67: #{tpu_custom_call.1} parent=63 // pred_region
          %428 = dma.done [#allocation4], 128
        $region68: #{tpu_custom_call.1} parent=63 // pred_fallthru
          _
        // Predicated region
        $region69: #{tpu_custom_call.1} parent=63 // pred_check
          %p429 = pneg %p138
        $region70: #{tpu_custom_call.1} parent=63 // pred_check_branch
          %431 = sbr.rel (%p429) target = $region72
        $region71: #{tpu_custom_call.1} parent=63 // pred_region
          %433 = dma.done [#allocation7], 128
        $region72: #{tpu_custom_call.1} parent=63 // pred_fallthru
          _
        %p434 = scmp.lt.s32.totalorder %s33, 1
        %s435 = scalar_select %p434, %s33, 1
        %s436 = smul.addr %s435, 2
        %s437 = smul.addr %s436, 8
        %s438 = scalar_lea.vmem %s0, %s437
        %p439 = pneg %p54
        %p440 = pneg %p51
        %p441 = pneg %p75
        %p442 = pneg %p72
        %p443 = pneg %p96
        %p444 = pneg %p93
        %p445 = pneg %p117
        %p446 = pneg %p114
        %p447 = pneg %p138
        %p448 = pneg %p135
        %p449 = pneg %p159
        %p450 = pneg %p156
        %p451 = pneg %p180
        %p452 = pneg %p177
        %p453 = pneg %p201
        %p454 = pneg %p198
        %p455 = pneg %p222
        %p456 = pneg %p219
        %p457 = pneg %p243
        %p458 = pneg %p240
        %p459 = pneg %p264
        %p460 = pneg %p261
        %p461 = pneg %p290
        %p462 = pneg %p287
        %s463 = sand.u32 %s277, 1
        %s464 = scalar_lea.sflag [#allocation5], %s463
        %s465 = sand.u32 %s277, 1
        %s466 = smul.addr %s465, 16
        %s467 = scalar_lea.vmem [#allocation8], %s466
        %p468 = pneg %p316
        %p469 = pneg %p313
        %s470 = sand.u32 %s303, 1
        %s471 = scalar_lea.sflag [#allocation10], %s470
        %s472 = sand.u32 %s303, 1
        %s473 = smul.addr %s472, 32
        %s474 = scalar_lea.vmem [#allocation9], %s473
        %p475 = pneg %p342
        %p476 = pneg %p339
        %p477 = scmp.lt.s32.totalorder %s33, 1
        %s478 = scalar_select %p477, %s33, 1
        %s479 = smul.addr %s478, 16
        %s480 = smul.addr %s479, 8
        %s481 = scalar_lea.vmem %s13, %s480
        %p482 = scmp.lt.s32.totalorder %s33, 1
        %s483 = scalar_select %p482, %s33, 1
        %s484 = smul.addr %s483, 2
        %s485 = smul.addr %s484, 8
        %s486 = scalar_lea.vmem %s0, %s485
        %p487 = scmp.lt.s32.totalorder %s33, 1
        %s488 = scalar_select %p487, %s33, 1
        %s489 = smul.addr %s488, 16
        %s490 = smul.addr %s489, 8
        %s491 = scalar_lea.vmem %s13, %s490
        %v492 = vld [vmem:[%s1] sm:$0xff]
        %v493 = vld [vmem:[%s1 + $0x8] sm:$0xff]
        %v494 = vld [vmem:[%s1 + $0x10] sm:$0x1]
        %v495 = vld [vmem:[%s1 + $0x18] sm:$0x1]
        %v496 = vld [vmem:[%s486] sm:$0xff]
        %v497 = vld [vmem:[%s486 + $0x8] sm:$0xff]
        %498 = vrot.lane.b32.xlu0 %v496, 17
        %v499 = vpop.permute.xlu0 %498
        %500 = vrot.lane.b32.xlu0 %v497, 17
        %v501 = vpop.permute.xlu0 %500
        %v502 = vlaneseq
        %v503 = vand.u32 %v502, 127
        %vm504 = vcmp.lt.s32.totalorder %v503, 17
        %v505 = vsel %vm504, %v499, %v501
        %v506 = vsel %vm504, %v501, %v499
        %v507 = vperm.slane %v492, 0
        %v508 = vperm.slane %v493, 0
        %v509 = vmul.f32 %v506, %v507
        %v510 = vmul.f32 %v505, %v508
        %511 = vst [vmem:[#allocation2] sm:$0xff] %v509
        %512 = vst [vmem:[#allocation2 + $0x8] sm:$0xff] %v510
        %513 = vrot.lane.b32.xlu0 %v496, 16
        %v514 = vpop.permute.xlu0 %513
        %515 = vrot.lane.b32.xlu0 %v497, 16
        %v516 = vpop.permute.xlu0 %515
        %vm517 = vcmp.lt.s32.totalorder %v503, 16
        %v518 = vsel %vm517, %v514, %v516
        %v519 = vsel %vm517, %v516, %v514
        %v520 = vperm.slane %v492, 1
        %v521 = vperm.slane %v493, 1
        %v522 = vmul.f32 %v519, %v520
        %v523 = vmul.f32 %v518, %v521
        %524 = vst [vmem:[#allocation2 + $0x10] sm:$0xff] %v522
        %525 = vst [vmem:[#allocation2 + $0x18] sm:$0xff] %v523
        %526 = vrot.lane.b32.xlu0 %v496, 15
        %v527 = vpop.permute.xlu0 %526
        %528 = vrot.lane.b32.xlu0 %v497, 15
        %v529 = vpop.permute.xlu0 %528
        %vm530 = vcmp.lt.s32.totalorder %v503, 15
        %v531 = vsel %vm530, %v527, %v529
        %v532 = vsel %vm530, %v529, %v527
        %v533 = vperm.slane %v492, 2
        %v534 = vperm.slane %v493, 2
        %v535 = vmul.f32 %v532, %v533
        %v536 = vmul.f32 %v531, %v534
        %537 = vst [vmem:[#allocation2 + $0x20] sm:$0xff] %v535
        %538 = vst [vmem:[#allocation2 + $0x28] sm:$0xff] %v536
        %539 = vrot.lane.b32.xlu0 %v496, 1
        %v540 = vpop.permute.xlu0 %539
        %541 = vrot.lane.b32.xlu0 %v497, 1
        %v542 = vpop.permute.xlu0 %541
        %vm543 = vcmp.lt.s32.totalorder %v503, 1
        %v544 = vsel %vm543, %v540, %v542
        %v545 = vsel %vm543, %v542, %v540
        %v546 = vperm.slane %v492, 3
        %v547 = vperm.slane %v493, 3
        %v548 = vmul.f32 %v545, %v546
        %v549 = vmul.f32 %v544, %v547
        %550 = vst [vmem:[#allocation2 + $0x30] sm:$0xff] %v548
        %551 = vst [vmem:[#allocation2 + $0x38] sm:$0xff] %v549
        %v552 = vperm.slane %v492, 4
        %v553 = vperm.slane %v493, 4
        %v554 = vmul.f32 %v496, %v552
        %v555 = vmul.f32 %v497, %v553
        %556 = vst [vmem:[#allocation2 + $0x40] sm:$0xff] %v554
        %557 = vst [vmem:[#allocation2 + $0x48] sm:$0xff] %v555
        %558 = vrot.lane.b32.xlu0 %v496, 127
        %v559 = vpop.permute.xlu0 %558
        %560 = vrot.lane.b32.xlu0 %v497, 127
        %v561 = vpop.permute.xlu0 %560
        %vm562 = vcmp.lt.s32.totalorder %v503, 127
        %v563 = vsel %vm562, %v559, %v561
        %v564 = vsel %vm562, %v561, %v559
        %v565 = vperm.slane %v492, 5
        %v566 = vperm.slane %v493, 5
        %v567 = vmul.f32 %v563, %v565
        %v568 = vmul.f32 %v564, %v566
        %569 = vst [vmem:[#allocation2 + $0x50] sm:$0xff] %v567
        %570 = vst [vmem:[#allocation2 + $0x58] sm:$0xff] %v568
        %571 = vrot.lane.b32.xlu0 %v496, 113
        %v572 = vpop.permute.xlu0 %571
        %573 = vrot.lane.b32.xlu0 %v497, 113
        %v574 = vpop.permute.xlu0 %573
        %vm575 = vcmp.lt.s32.totalorder %v503, 113
        %v576 = vsel %vm575, %v572, %v574
        %v577 = vsel %vm575, %v574, %v572
        %v578 = vperm.slane %v492, 6
        %v579 = vperm.slane %v493, 6
        %v580 = vmul.f32 %v576, %v578
        %v581 = vmul.f32 %v577, %v579
        %582 = vst [vmem:[#allocation2 + $0x60] sm:$0xff] %v580
        %583 = vst [vmem:[#allocation2 + $0x68] sm:$0xff] %v581
        %584 = vrot.lane.b32.xlu0 %v496, 112
        %v585 = vpop.permute.xlu0 %584
        %586 = vrot.lane.b32.xlu0 %v497, 112
        %v587 = vpop.permute.xlu0 %586
        %vm588 = vcmp.lt.s32.totalorder %v503, 112
        %v589 = vsel %vm588, %v585, %v587
        %v590 = vsel %vm588, %v587, %v585
        %v591 = vperm.slane %v492, 7
        %v592 = vperm.slane %v493, 7
        %v593 = vmul.f32 %v589, %v591
        %v594 = vmul.f32 %v590, %v592
        %595 = vst [vmem:[#allocation2 + $0x70] sm:$0xff] %v593
        %596 = vst [vmem:[#allocation2 + $0x78] sm:$0xff] %v594
        %597 = vrot.lane.b32.xlu0 %v496, 111
        %v598 = vpop.permute.xlu0 %597
        %599 = vrot.lane.b32.xlu0 %v497, 111
        %v600 = vpop.permute.xlu0 %599
        %vm601 = vcmp.lt.s32.totalorder %v503, 111
        %v602 = vsel %vm601, %v598, %v600
        %v603 = vsel %vm601, %v600, %v598
        %v604 = vperm.slane %v494, 0
        %v605 = vperm.slane %v495, 0
        %v606 = vmul.f32 %v602, %v604
        %v607 = vmul.f32 %v603, %v605
        %608 = vst [vmem:[#allocation2 + $0x80] sm:$0xff] %v606
        %609 = vst [vmem:[#allocation2 + $0x88] sm:$0xff] %v607
        %v610 = vld [vmem:[#allocation3] sm:$0xff]
        %v611 = vld [vmem:[#allocation2] sm:$0xff]
        %v612 = vld [vmem:[#allocation2 + $0x8] sm:$0xff]
        %v613 = vld [vmem:[#allocation2 + $0x10] sm:$0xff]
        %v614 = vld [vmem:[#allocation2 + $0x18] sm:$0xff]
        %v615 = vld [vmem:[#allocation2 + $0x20] sm:$0xff]
        %v616 = vld [vmem:[#allocation2 + $0x28] sm:$0xff]
        %v617 = vld [vmem:[#allocation2 + $0x30] sm:$0xff]
        %v618 = vld [vmem:[#allocation2 + $0x38] sm:$0xff]
        %v619 = vld [vmem:[#allocation2 + $0x40] sm:$0xff]
        %v620 = vld [vmem:[#allocation2 + $0x48] sm:$0xff]
        %v621 = vld [vmem:[#allocation2 + $0x50] sm:$0xff]
        %v622 = vld [vmem:[#allocation2 + $0x58] sm:$0xff]
        %v623 = vld [vmem:[#allocation2 + $0x60] sm:$0xff]
        %v624 = vld [vmem:[#allocation2 + $0x68] sm:$0xff]
        %v625 = vld [vmem:[#allocation2 + $0x70] sm:$0xff]
        %v626 = vld [vmem:[#allocation2 + $0x78] sm:$0xff]
        %v627 = vld [vmem:[#allocation2 + $0x80] sm:$0xff]
        %v628 = vld [vmem:[#allocation2 + $0x88] sm:$0xff]
        %v629 = vld [vmem:[%s3] sm:$0xff]
        %631 = vset.pattern.permute.xlu0 0
        %632 = vperm.xlu0 %631, %v629
        %v633 = vpop.permute.xlu0 %632
        %vm635 = vcmask 588800
        %v637 = vsel %vm635, %v610, 0
        %639 = vmatpush.msra.mxu0 0.0
        %640 = vmatpush.msra.mxu0 0.0
        %641 = vmatpush.msra.mxu0 0.0
        %642 = vmatpush.msra.mxu0 0.0
        %643 = vmatpush.msra.mxu0 0.0
        %644 = vmatpush.msra.mxu0 0.0
        %645 = vmatpush.msra.mxu0 0.0
        %646 = vmatpush.msra.mxu0 %v627
        %647 = vmatpush.msra.mxu0 %v625
        %648 = vmatpush.msra.mxu0 %v623
        %649 = vmatpush.msra.mxu0 %v621
        %650 = vmatpush.msra.mxu0 %v619
        %651 = vmatpush.msra.mxu0 %v617
        %652 = vmatpush.msra.mxu0 %v615
        %653 = vmatpush.msra.mxu0 %v613
        %654 = vmatpush.msra.mxu0 %v611
        %655 = vmatmul.f32.gmra.mxu0 %v637
        %v656 = vpop.f32.mrf.mxu0
        %v657 = vadd.f32 %v633, %v656
        %658 = vdwg.mxu0
        %659 = vmatpush.msra.mxu0 0.0
        %660 = vmatpush.msra.mxu0 0.0
        %661 = vmatpush.msra.mxu0 0.0
        %662 = vmatpush.msra.mxu0 0.0
        %663 = vmatpush.msra.mxu0 0.0
        %664 = vmatpush.msra.mxu0 0.0
        %665 = vmatpush.msra.mxu0 0.0
        %666 = vmatpush.msra.mxu0 %v628
        %667 = vmatpush.msra.mxu0 %v626
        %668 = vmatpush.msra.mxu0 %v624
        %669 = vmatpush.msra.mxu0 %v622
        %670 = vmatpush.msra.mxu0 %v620
        %671 = vmatpush.msra.mxu0 %v618
        %672 = vmatpush.msra.mxu0 %v616
        %673 = vmatpush.msra.mxu0 %v614
        %674 = vmatpush.msra.mxu0 %v612
        %675 = vmatmul.f32.gmra.mxu0 %v637
        %v676 = vpop.f32.mrf.mxu0
        %v677 = vadd.f32 %v633, %v676
        %678 = vdwg.mxu0
        %vm679 = vcmp.gt.f32.partialorder %v657, 0.0
        %vm680 = vcmp.gt.f32.partialorder %v677, 0.0
        %v681 = vmul.f32 %v657, 0.1
        %v682 = vmul.f32 %v677, 0.1
        %v683 = vsel %vm679, %v657, %v681
        %v684 = vsel %vm680, %v677, %v682
        %685 = vrot.lane.b32.xlu0 %v683, 17
        %v686 = vpop.permute.xlu0 %685
        %687 = vrot.lane.b32.xlu0 %v684, 17
        %v688 = vpop.permute.xlu0 %687
        %v689 = vsel %vm504, %v686, %v688
        %v690 = vsel %vm504, %v688, %v686
        %v691 = vmul.f32 %v690, %v507
        %v692 = vmul.f32 %v689, %v508
        %693 = vst [vmem:[#allocation2] sm:$0xff] %v691
        %694 = vst [vmem:[#allocation2 + $0x8] sm:$0xff] %v692
        %695 = vrot.lane.b32.xlu0 %v683, 16
        %v696 = vpop.permute.xlu0 %695
        %697 = vrot.lane.b32.xlu0 %v684, 16
        %v698 = vpop.permute.xlu0 %697
        %v699 = vsel %vm517, %v696, %v698
        %v700 = vsel %vm517, %v698, %v696
        %v701 = vmul.f32 %v700, %v520
        %v702 = vmul.f32 %v699, %v521
        %703 = vst [vmem:[#allocation2 + $0x10] sm:$0xff] %v701
        %704 = vst [vmem:[#allocation2 + $0x18] sm:$0xff] %v702
        %705 = vrot.lane.b32.xlu0 %v683, 15
        %v706 = vpop.permute.xlu0 %705
        %707 = vrot.lane.b32.xlu0 %v684, 15
        %v708 = vpop.permute.xlu0 %707
        %v709 = vsel %vm530, %v706, %v708
        %v710 = vsel %vm530, %v708, %v706
        %v711 = vmul.f32 %v710, %v533
        %v712 = vmul.f32 %v709, %v534
        %713 = vst [vmem:[#allocation2 + $0x20] sm:$0xff] %v711
        %714 = vst [vmem:[#allocation2 + $0x28] sm:$0xff] %v712
        %715 = vrot.lane.b32.xlu0 %v683, 1
        %v716 = vpop.permute.xlu0 %715
        %717 = vrot.lane.b32.xlu0 %v684, 1
        %v718 = vpop.permute.xlu0 %717
        %v719 = vsel %vm543, %v716, %v718
        %v720 = vsel %vm543, %v718, %v716
        %v721 = vmul.f32 %v720, %v546
        %v722 = vmul.f32 %v719, %v547
        %723 = vst [vmem:[#allocation2 + $0x30] sm:$0xff] %v721
        %724 = vst [vmem:[#allocation2 + $0x38] sm:$0xff] %v722
        %v725 = vmul.f32 %v683, %v552
        %v726 = vmul.f32 %v684, %v553
        %727 = vst [vmem:[#allocation2 + $0x40] sm:$0xff] %v725
        %728 = vst [vmem:[#allocation2 + $0x48] sm:$0xff] %v726
        %729 = vrot.lane.b32.xlu0 %v683, 127
        %v730 = vpop.permute.xlu0 %729
        %731 = vrot.lane.b32.xlu0 %v684, 127
        %v732 = vpop.permute.xlu0 %731
        %v733 = vsel %vm562, %v730, %v732
        %v734 = vsel %vm562, %v732, %v730
        %v735 = vmul.f32 %v733, %v565
        %v736 = vmul.f32 %v734, %v566
        %737 = vst [vmem:[#allocation2 + $0x50] sm:$0xff] %v735
        %738 = vst [vmem:[#allocation2 + $0x58] sm:$0xff] %v736
        %739 = vrot.lane.b32.xlu0 %v683, 113
        %v740 = vpop.permute.xlu0 %739
        %741 = vrot.lane.b32.xlu0 %v684, 113
        %v742 = vpop.permute.xlu0 %741
        %v743 = vsel %vm575, %v740, %v742
        %v744 = vsel %vm575, %v742, %v740
        %v745 = vmul.f32 %v743, %v578
        %v746 = vmul.f32 %v744, %v579
        %747 = vst [vmem:[#allocation2 + $0x60] sm:$0xff] %v745
        %748 = vst [vmem:[#allocation2 + $0x68] sm:$0xff] %v746
        %749 = vrot.lane.b32.xlu0 %v683, 112
        %v750 = vpop.permute.xlu0 %749
        %751 = vrot.lane.b32.xlu0 %v684, 112
        %v752 = vpop.permute.xlu0 %751
        %v753 = vsel %vm588, %v750, %v752
        %v754 = vsel %vm588, %v752, %v750
        %v755 = vmul.f32 %v753, %v591
        %v756 = vmul.f32 %v754, %v592
        %757 = vst [vmem:[#allocation2 + $0x70] sm:$0xff] %v755
        %758 = vst [vmem:[#allocation2 + $0x78] sm:$0xff] %v756
        %759 = vrot.lane.b32.xlu0 %v683, 111
        %v760 = vpop.permute.xlu0 %759
        %761 = vrot.lane.b32.xlu0 %v684, 111
        %v762 = vpop.permute.xlu0 %761
        %v763 = vsel %vm601, %v760, %v762
        %v764 = vsel %vm601, %v762, %v760
        %v765 = vmul.f32 %v763, %v604
        %v766 = vmul.f32 %v764, %v605
        %767 = vst [vmem:[#allocation2 + $0x80] sm:$0xff] %v765
        %768 = vst [vmem:[#allocation2 + $0x88] sm:$0xff] %v766
        %v769 = vld [vmem:[#allocation6] sm:$0xff]
        %v770 = vld [vmem:[#allocation2] sm:$0xff]
        %v771 = vld [vmem:[#allocation2 + $0x8] sm:$0xff]
        %v772 = vld [vmem:[#allocation2 + $0x10] sm:$0xff]
        %v773 = vld [vmem:[#allocation2 + $0x18] sm:$0xff]
        %v774 = vld [vmem:[#allocation2 + $0x20] sm:$0xff]
        %v775 = vld [vmem:[#allocation2 + $0x28] sm:$0xff]
        %v776 = vld [vmem:[#allocation2 + $0x30] sm:$0xff]
        %v777 = vld [vmem:[#allocation2 + $0x38] sm:$0xff]
        %v778 = vld [vmem:[#allocation2 + $0x40] sm:$0xff]
        %v779 = vld [vmem:[#allocation2 + $0x48] sm:$0xff]
        %v780 = vld [vmem:[#allocation2 + $0x50] sm:$0xff]
        %v781 = vld [vmem:[#allocation2 + $0x58] sm:$0xff]
        %v782 = vld [vmem:[#allocation2 + $0x60] sm:$0xff]
        %v783 = vld [vmem:[#allocation2 + $0x68] sm:$0xff]
        %v784 = vld [vmem:[#allocation2 + $0x70] sm:$0xff]
        %v785 = vld [vmem:[#allocation2 + $0x78] sm:$0xff]
        %v786 = vld [vmem:[#allocation2 + $0x80] sm:$0xff]
        %v787 = vld [vmem:[#allocation2 + $0x88] sm:$0xff]
        %v788 = vld [vmem:[%s5] sm:$0xff]
        %790 = vset.pattern.permute.xlu0 0
        %791 = vperm.xlu0 %790, %v788
        %v792 = vpop.permute.xlu0 %791
        %v795 = vsel %vm635, %v769, 0
        %797 = vmatpush.msra.mxu0 0.0
        %798 = vmatpush.msra.mxu0 0.0
        %799 = vmatpush.msra.mxu0 0.0
        %800 = vmatpush.msra.mxu0 0.0
        %801 = vmatpush.msra.mxu0 0.0
        %802 = vmatpush.msra.mxu0 0.0
        %803 = vmatpush.msra.mxu0 0.0
        %804 = vmatpush.msra.mxu0 %v786
        %805 = vmatpush.msra.mxu0 %v784
        %806 = vmatpush.msra.mxu0 %v782
        %807 = vmatpush.msra.mxu0 %v780
        %808 = vmatpush.msra.mxu0 %v778
        %809 = vmatpush.msra.mxu0 %v776
        %810 = vmatpush.msra.mxu0 %v774
        %811 = vmatpush.msra.mxu0 %v772
        %812 = vmatpush.msra.mxu0 %v770
        %813 = vmatmul.f32.gmra.mxu0 %v795
        %v814 = vpop.f32.mrf.mxu0
        %v815 = vadd.f32 %v792, %v814
        %816 = vdwg.mxu0
        %817 = vmatpush.msra.mxu0 0.0
        %818 = vmatpush.msra.mxu0 0.0
        %819 = vmatpush.msra.mxu0 0.0
        %820 = vmatpush.msra.mxu0 0.0
        %821 = vmatpush.msra.mxu0 0.0
        %822 = vmatpush.msra.mxu0 0.0
        %823 = vmatpush.msra.mxu0 0.0
        %824 = vmatpush.msra.mxu0 %v787
        %825 = vmatpush.msra.mxu0 %v785
        %826 = vmatpush.msra.mxu0 %v783
        %827 = vmatpush.msra.mxu0 %v781
        %828 = vmatpush.msra.mxu0 %v779
        %829 = vmatpush.msra.mxu0 %v777
        %830 = vmatpush.msra.mxu0 %v775
        %831 = vmatpush.msra.mxu0 %v773
        %832 = vmatpush.msra.mxu0 %v771
        %833 = vmatmul.f32.gmra.mxu0 %v795
        %v834 = vpop.f32.mrf.mxu0
        %v835 = vadd.f32 %v792, %v834
        %836 = vdwg.mxu0
        %vm837 = vcmp.gt.f32.partialorder %v815, 0.0
        %vm838 = vcmp.gt.f32.partialorder %v835, 0.0
        %v839 = vmul.f32 %v815, 0.1
        %v840 = vmul.f32 %v835, 0.1
        %v841 = vsel %vm837, %v815, %v839
        %v842 = vsel %vm838, %v835, %v840
        %v843 = vadd.f32 %v841, %v683
        %v844 = vadd.f32 %v842, %v684
        %vm845 = vcmp.gt.f32.partialorder %v843, 0.0
        %vm846 = vcmp.gt.f32.partialorder %v844, 0.0
        %v847 = vmul.f32 %v843, 0.1
        %v848 = vmul.f32 %v844, 0.1
        %v849 = vsel %vm845, %v843, %v847
        %v850 = vsel %vm846, %v844, %v848
        %851 = vst [vmem:[%s467] sm:$0xff] %v849
        %852 = vst [vmem:[%s467 + $0x8] sm:$0xff] %v850
        %v853 = vld [vmem:[%s6] sm:$0xff]
        %v854 = vld [vmem:[%s6 + $0x8] sm:$0xff]
        %v855 = vld [vmem:[%s7] sm:$0xff]
        %v856 = vld [vmem:[%s7 + $0x8] sm:$0xff]
        %858 = vset.pattern.permute.xlu0 0
        %859 = vperm.xlu0 %858, %v855
        %v860 = vpop.permute.xlu0 %859
        %863 = vset.pattern.permute.xlu0 0
        %864 = vperm.xlu0 %863, %v856
        %v865 = vpop.permute.xlu0 %864
        %vm867 = vcmask 64512
        %v869 = vsel %vm867, %v853, 0
        %v872 = vsel %vm867, %v854, 0
        %874 = vmatpush.msra.mxu0 0.0
        %875 = vmatpush.msra.mxu0 0.0
        %876 = vmatpush.msra.mxu0 0.0
        %877 = vmatpush.msra.mxu0 0.0
        %878 = vmatpush.msra.mxu0 0.0
        %879 = vmatpush.msra.mxu0 0.0
        %880 = vmatpush.msra.mxu0 0.0
        %881 = vmatpush.msra.mxu0 0.0
        %882 = vmatpush.msra.mxu0 0.0
        %883 = vmatpush.msra.mxu0 0.0
        %884 = vmatpush.msra.mxu0 0.0
        %885 = vmatpush.msra.mxu0 0.0
        %886 = vmatpush.msra.mxu0 0.0
        %887 = vmatpush.msra.mxu0 0.0
        %888 = vmatpush.msra.mxu0 0.0
        %889 = vmatpush.msra.mxu0 %v849
        %890 = vmatmul.f32.gmra.mxu0 %v869
        %v891 = vpop.f32.mrf.mxu0
        %v892 = vadd.f32 %v860, %v891
        %893 = vmatmul.f32.gmra.mxu0 %v872
        %v894 = vpop.f32.mrf.mxu0
        %v895 = vadd.f32 %v865, %v894
        %896 = vdwg.mxu0
        %897 = vmatpush.msra.mxu0 0.0
        %898 = vmatpush.msra.mxu0 0.0
        %899 = vmatpush.msra.mxu0 0.0
        %900 = vmatpush.msra.mxu0 0.0
        %901 = vmatpush.msra.mxu0 0.0
        %902 = vmatpush.msra.mxu0 0.0
        %903 = vmatpush.msra.mxu0 0.0
        %904 = vmatpush.msra.mxu0 0.0
        %905 = vmatpush.msra.mxu0 0.0
        %906 = vmatpush.msra.mxu0 0.0
        %907 = vmatpush.msra.mxu0 0.0
        %908 = vmatpush.msra.mxu0 0.0
        %909 = vmatpush.msra.mxu0 0.0
        %910 = vmatpush.msra.mxu0 0.0
        %911 = vmatpush.msra.mxu0 0.0
        %912 = vmatpush.msra.mxu0 %v850
        %913 = vmatmul.f32.gmra.mxu0 %v869
        %v914 = vpop.f32.mrf.mxu0
        %v915 = vadd.f32 %v860, %v914
        %916 = vmatmul.f32.gmra.mxu0 %v872
        %v917 = vpop.f32.mrf.mxu0
        %v918 = vadd.f32 %v865, %v917
        %919 = vdwg.mxu0
        %vm920 = vcmp.gt.f32.partialorder %v892, 0.0
        %vm921 = vcmp.gt.f32.partialorder %v915, 0.0
        %vm922 = vcmp.gt.f32.partialorder %v895, 0.0
        %vm923 = vcmp.gt.f32.partialorder %v918, 0.0
        %v924 = vmul.f32 %v892, 0.1
        %v925 = vmul.f32 %v915, 0.1
        %v926 = vmul.f32 %v895, 0.1
        %v927 = vmul.f32 %v918, 0.1
        %v928 = vsel %vm920, %v892, %v924
        %v929 = vsel %vm921, %v915, %v925
        %v930 = vsel %vm922, %v895, %v926
        %v931 = vsel %vm923, %v918, %v927
        %932 = vst [vmem:[%s474] sm:$0xff] %v928
        %933 = vst [vmem:[%s474 + $0x8] sm:$0xff] %v929
        %934 = vst [vmem:[%s474 + $0x10] sm:$0xff] %v930
        %935 = vst [vmem:[%s474 + $0x18] sm:$0xff] %v931
        %936 = vst [vmem:[#allocation2] sm:$0xff] %v849
        %937 = vst [vmem:[#allocation2 + $0x8] sm:$0xff] %v850
        %938 = vrot.lane.b32.xlu0 %v849, 127
        %v939 = vpop.permute.xlu0 %938
        %940 = vrot.lane.b32.xlu0 %v850, 127
        %v941 = vpop.permute.xlu0 %940
        %v942 = vsel %vm562, %v939, %v941
        %v943 = vsel %vm562, %v941, %v939
        %944 = vst [vmem:[#allocation2 + $0x10] sm:$0xff] %v942
        %945 = vst [vmem:[#allocation2 + $0x18] sm:$0xff] %v943
        %946 = vrot.lane.b32.xlu0 %v849, 112
        %v947 = vpop.permute.xlu0 %946
        %948 = vrot.lane.b32.xlu0 %v850, 112
        %v949 = vpop.permute.xlu0 %948
        %v950 = vsel %vm588, %v947, %v949
        %v951 = vsel %vm588, %v949, %v947
        %952 = vst [vmem:[#allocation2 + $0x20] sm:$0xff] %v950
        %953 = vst [vmem:[#allocation2 + $0x28] sm:$0xff] %v951
        %954 = vrot.lane.b32.xlu0 %v849, 111
        %v955 = vpop.permute.xlu0 %954
        %956 = vrot.lane.b32.xlu0 %v850, 111
        %v957 = vpop.permute.xlu0 %956
        %v958 = vsel %vm601, %v955, %v957
        %v959 = vsel %vm601, %v957, %v955
        %960 = vst [vmem:[#allocation2 + $0x30] sm:$0xff] %v958
        %961 = vst [vmem:[#allocation2 + $0x38] sm:$0xff] %v959
        %v962 = vld [vmem:[%s8] sm:$0xff]
        %v963 = vld [vmem:[%s8 + $0x8] sm:$0xff]
        %v964 = vld [vmem:[#allocation2] sm:$0xff]
        %v965 = vld [vmem:[#allocation2 + $0x8] sm:$0xff]
        %v966 = vld [vmem:[#allocation2 + $0x10] sm:$0xff]
        %v967 = vld [vmem:[#allocation2 + $0x18] sm:$0xff]
        %v968 = vld [vmem:[#allocation2 + $0x20] sm:$0xff]
        %v969 = vld [vmem:[#allocation2 + $0x28] sm:$0xff]
        %v970 = vld [vmem:[#allocation2 + $0x30] sm:$0xff]
        %v971 = vld [vmem:[#allocation2 + $0x38] sm:$0xff]
        %vm972 = vcmask 261120
        %v974 = vsel %vm972, %v962, 0
        %v977 = vsel %vm972, %v963, 0
        %979 = vmatpush.msra.mxu0 0.0
        %980 = vmatpush.msra.mxu0 0.0
        %981 = vmatpush.msra.mxu0 0.0
        %982 = vmatpush.msra.mxu0 0.0
        %983 = vmatpush.msra.mxu0 0.0
        %984 = vmatpush.msra.mxu0 0.0
        %985 = vmatpush.msra.mxu0 0.0
        %986 = vmatpush.msra.mxu0 0.0
        %987 = vmatpush.msra.mxu0 0.0
        %988 = vmatpush.msra.mxu0 0.0
        %989 = vmatpush.msra.mxu0 0.0
        %990 = vmatpush.msra.mxu0 0.0
        %991 = vmatpush.msra.mxu0 %v970
        %992 = vmatpush.msra.mxu0 %v968
        %993 = vmatpush.msra.mxu0 %v966
        %994 = vmatpush.msra.mxu0 %v964
        %995 = vmatmul.f32.gmra.mxu0 %v974
        %v996 = vpop.f32.mrf.mxu0
        %v997 = vadd.f32 0.0, %v996
        %998 = vmatmul.f32.gmra.mxu0 %v977
        %v999 = vpop.f32.mrf.mxu0
        %v1000 = vadd.f32 0.0, %v999
        %1001 = vdwg.mxu0
        %1002 = vmatpush.msra.mxu0 0.0
        %1003 = vmatpush.msra.mxu0 0.0
        %1004 = vmatpush.msra.mxu0 0.0
        %1005 = vmatpush.msra.mxu0 0.0
        %1006 = vmatpush.msra.mxu0 0.0
        %1007 = vmatpush.msra.mxu0 0.0
        %1008 = vmatpush.msra.mxu0 0.0
        %1009 = vmatpush.msra.mxu0 0.0
        %1010 = vmatpush.msra.mxu0 0.0
        %1011 = vmatpush.msra.mxu0 0.0
        %1012 = vmatpush.msra.mxu0 0.0
        %1013 = vmatpush.msra.mxu0 0.0
        %1014 = vmatpush.msra.mxu0 %v971
        %1015 = vmatpush.msra.mxu0 %v969
        %1016 = vmatpush.msra.mxu0 %v967
        %1017 = vmatpush.msra.mxu0 %v965
        %1018 = vmatmul.f32.gmra.mxu0 %v974
        %v1019 = vpop.f32.mrf.mxu0
        %v1020 = vadd.f32 0.0, %v1019
        %1021 = vmatmul.f32.gmra.mxu0 %v977
        %v1022 = vpop.f32.mrf.mxu0
        %v1023 = vadd.f32 0.0, %v1022
        %1024 = vdwg.mxu0
        %v1025 = vld [vmem:[%s9] sm:$0xff]
        %v1026 = vld [vmem:[%s9 + $0x8] sm:$0xff]
        %v1027 = vld [vmem:[%s10] sm:$0xff]
        %v1028 = vld [vmem:[%s10 + $0x8] sm:$0xff]
        %1030 = vset.pattern.permute.xlu0 0
        %1031 = vperm.xlu0 %1030, %v1025
        %v1032 = vpop.permute.xlu0 %1031
        %1035 = vset.pattern.permute.xlu0 0
        %1036 = vperm.xlu0 %1035, %v1026
        %v1037 = vpop.permute.xlu0 %1036
        %vm1039 = vcmask 130048
        %v1041 = vsel %vm1039, %v997, 0
        %v1044 = vsel %vm1039, %v1000, 0
        %1046 = vmatpush.msra.mxu0 0.0
        %1047 = vmatpush.msra.mxu0 0.0
        %1048 = vmatpush.msra.mxu0 0.0
        %1049 = vmatpush.msra.mxu0 0.0
        %1050 = vmatpush.msra.mxu0 0.0
        %1051 = vmatpush.msra.mxu0 0.0
        %1052 = vmatpush.msra.mxu0 0.0
        %1053 = vmatpush.msra.mxu0 0.0
        %1054 = vmatpush.msra.mxu0 0.0
        %1055 = vmatpush.msra.mxu0 0.0
        %1056 = vmatpush.msra.mxu0 0.0
        %1057 = vmatpush.msra.mxu0 0.0
        %1058 = vmatpush.msra.mxu0 0.0
        %1059 = vmatpush.msra.mxu0 0.0
        %1060 = vmatpush.msra.mxu0 %v1028
        %1061 = vmatpush.msra.mxu0 %v1027
        %1062 = vmatmul.f32.gmra.mxu0 %v1041
        %v1063 = vpop.f32.mrf.mxu0
        %v1064 = vadd.f32 %v1032, %v1063
        %1065 = vmatmul.f32.gmra.mxu0 %v1044
        %v1066 = vpop.f32.mrf.mxu0
        %v1067 = vadd.f32 %v1037, %v1066
        %1068 = vdwg.mxu0
        %vm1069 = vcmp.gt.f32.partialorder %v1064, 0.0
        %vm1070 = vcmp.gt.f32.partialorder %v1067, 0.0
        %v1071 = vmul.f32 %v1064, 0.1
        %v1072 = vmul.f32 %v1067, 0.1
        %v1073 = vsel %vm1069, %v1064, %v1071
        %v1074 = vsel %vm1070, %v1067, %v1072
        %v1077 = vrot.slane %v1073, 1
        %v1078 = vrot.slane %v1073, 2
        %v1079 = vrot.slane %v1073, 3
        %v1080 = vrot.slane %v1073, 4
        %v1081 = vrot.slane %v1073, 5
        %v1082 = vrot.slane %v1073, 6
        %v1083 = vrot.slane %v1073, 7
        %v1084 = vrot.slane %v1074, 1
        %v1085 = vrot.slane %v1074, 2
        %v1086 = vrot.slane %v1074, 3
        %v1087 = vrot.slane %v1074, 4
        %v1088 = vrot.slane %v1074, 5
        %v1089 = vrot.slane %v1074, 6
        %v1090 = vrot.slane %v1074, 7
        %vm1105 = vcmask 57344
        %1106 = vst.msk [vmem:[%s491] sm:$0x1] %vm1105, %v1073
        %1107 = vst.msk [vmem:[%s491 + $0x8] sm:$0x1] %vm1105, %v1077
        %1108 = vst.msk [vmem:[%s491 + $0x10] sm:$0x1] %vm1105, %v1078
        %1109 = vst.msk [vmem:[%s491 + $0x18] sm:$0x1] %vm1105, %v1079
        %1110 = vst.msk [vmem:[%s491 + $0x20] sm:$0x1] %vm1105, %v1080
        %1111 = vst.msk [vmem:[%s491 + $0x28] sm:$0x1] %vm1105, %v1081
        %1112 = vst.msk [vmem:[%s491 + $0x30] sm:$0x1] %vm1105, %v1082
        %1113 = vst.msk [vmem:[%s491 + $0x38] sm:$0x1] %vm1105, %v1083
        %1114 = vst.msk [vmem:[%s491 + $0x40] sm:$0x1] %vm1105, %v1074
        %1115 = vst.msk [vmem:[%s491 + $0x48] sm:$0x1] %vm1105, %v1084
        %1116 = vst.msk [vmem:[%s491 + $0x50] sm:$0x1] %vm1105, %v1085
        %1117 = vst.msk [vmem:[%s491 + $0x58] sm:$0x1] %vm1105, %v1086
        %1118 = vst.msk [vmem:[%s491 + $0x60] sm:$0x1] %vm1105, %v1087
        %1119 = vst.msk [vmem:[%s491 + $0x68] sm:$0x1] %vm1105, %v1088
        %1120 = vst.msk [vmem:[%s491 + $0x70] sm:$0x1] %vm1105, %v1089
        %1121 = vst.msk [vmem:[%s491 + $0x78] sm:$0x1] %vm1105, %v1090
        %1122 = vrot.lane.b32.xlu0 %v997, 96
        %v1123 = vpop.permute.xlu0 %1122
        %1124 = vrot.lane.b32.xlu0 %v1000, 96
        %v1125 = vpop.permute.xlu0 %1124
        %v1126 = vsel %vm1039, %v1123, 0
        %v1128 = vsel %vm1039, %v1125, 0
        %1130 = vmatpush.msra.mxu0 0.0
        %1131 = vmatpush.msra.mxu0 0.0
        %1132 = vmatpush.msra.mxu0 0.0
        %1133 = vmatpush.msra.mxu0 0.0
        %1134 = vmatpush.msra.mxu0 0.0
        %1135 = vmatpush.msra.mxu0 0.0
        %1136 = vmatpush.msra.mxu0 0.0
        %1137 = vmatpush.msra.mxu0 0.0
        %1138 = vmatpush.msra.mxu0 0.0
        %1139 = vmatpush.msra.mxu0 0.0
        %1140 = vmatpush.msra.mxu0 0.0
        %1141 = vmatpush.msra.mxu0 0.0
        %1142 = vmatpush.msra.mxu0 0.0
        %1143 = vmatpush.msra.mxu0 0.0
        %1144 = vmatpush.msra.mxu0 %v1028
        %1145 = vmatpush.msra.mxu0 %v1027
        %1146 = vmatmul.f32.gmra.mxu0 %v1126
        %v1147 = vpop.f32.mrf.mxu0
        %v1148 = vadd.f32 %v1032, %v1147
        %1149 = vmatmul.f32.gmra.mxu0 %v1128
        %v1150 = vpop.f32.mrf.mxu0
        %v1151 = vadd.f32 %v1037, %v1150
        %1152 = vdwg.mxu0
        %vm1153 = vcmp.gt.f32.partialorder %v1148, 0.0
        %vm1154 = vcmp.gt.f32.partialorder %v1151, 0.0
        %v1155 = vmul.f32 %v1148, 0.1
        %v1156 = vmul.f32 %v1151, 0.1
        %v1157 = vsel %vm1153, %v1148, %v1155
        %v1158 = vsel %vm1154, %v1151, %v1156
        %v1161 = vrot.slane %v1157, 1
        %v1162 = vrot.slane %v1157, 2
        %v1163 = vrot.slane %v1157, 3
        %v1164 = vrot.slane %v1157, 4
        %v1165 = vrot.slane %v1157, 5
        %v1166 = vrot.slane %v1157, 6
        %v1167 = vrot.slane %v1157, 7
        %v1168 = vrot.slane %v1158, 1
        %v1169 = vrot.slane %v1158, 2
        %v1170 = vrot.slane %v1158, 3
        %v1171 = vrot.slane %v1158, 4
        %v1172 = vrot.slane %v1158, 5
        %v1173 = vrot.slane %v1158, 6
        %v1174 = vrot.slane %v1158, 7
        %1189 = vst.msk [vmem:[%s491 + $0x1] sm:$0x1] %vm1105, %v1157
        %1190 = vst.msk [vmem:[%s491 + $0x9] sm:$0x1] %vm1105, %v1161
        %1191 = vst.msk [vmem:[%s491 + $0x11] sm:$0x1] %vm1105, %v1162
        %1192 = vst.msk [vmem:[%s491 + $0x19] sm:$0x1] %vm1105, %v1163
        %1193 = vst.msk [vmem:[%s491 + $0x21] sm:$0x1] %vm1105, %v1164
        %1194 = vst.msk [vmem:[%s491 + $0x29] sm:$0x1] %vm1105, %v1165
        %1195 = vst.msk [vmem:[%s491 + $0x31] sm:$0x1] %vm1105, %v1166
        %1196 = vst.msk [vmem:[%s491 + $0x39] sm:$0x1] %vm1105, %v1167
        %1197 = vst.msk [vmem:[%s491 + $0x41] sm:$0x1] %vm1105, %v1158
        %1198 = vst.msk [vmem:[%s491 + $0x49] sm:$0x1] %vm1105, %v1168
        %1199 = vst.msk [vmem:[%s491 + $0x51] sm:$0x1] %vm1105, %v1169
        %1200 = vst.msk [vmem:[%s491 + $0x59] sm:$0x1] %vm1105, %v1170
        %1201 = vst.msk [vmem:[%s491 + $0x61] sm:$0x1] %vm1105, %v1171
        %1202 = vst.msk [vmem:[%s491 + $0x69] sm:$0x1] %vm1105, %v1172
        %1203 = vst.msk [vmem:[%s491 + $0x71] sm:$0x1] %vm1105, %v1173
        %1204 = vst.msk [vmem:[%s491 + $0x79] sm:$0x1] %vm1105, %v1174
        %1205 = vrot.lane.b32.xlu0 %v997, 64
        %v1206 = vpop.permute.xlu0 %1205
        %1207 = vrot.lane.b32.xlu0 %v1000, 64
        %v1208 = vpop.permute.xlu0 %1207
        %v1209 = vsel %vm1039, %v1206, 0
        %v1211 = vsel %vm1039, %v1208, 0
        %1213 = vmatpush.msra.mxu0 0.0
        %1214 = vmatpush.msra.mxu0 0.0
        %1215 = vmatpush.msra.mxu0 0.0
        %1216 = vmatpush.msra.mxu0 0.0
        %1217 = vmatpush.msra.mxu0 0.0
        %1218 = vmatpush.msra.mxu0 0.0
        %1219 = vmatpush.msra.mxu0 0.0
        %1220 = vmatpush.msra.mxu0 0.0
        %1221 = vmatpush.msra.mxu0 0.0
        %1222 = vmatpush.msra.mxu0 0.0
        %1223 = vmatpush.msra.mxu0 0.0
        %1224 = vmatpush.msra.mxu0 0.0
        %1225 = vmatpush.msra.mxu0 0.0
        %1226 = vmatpush.msra.mxu0 0.0
        %1227 = vmatpush.msra.mxu0 %v1028
        %1228 = vmatpush.msra.mxu0 %v1027
        %1229 = vmatmul.f32.gmra.mxu0 %v1209
        %v1230 = vpop.f32.mrf.mxu0
        %v1231 = vadd.f32 %v1032, %v1230
        %1232 = vmatmul.f32.gmra.mxu0 %v1211
        %v1233 = vpop.f32.mrf.mxu0
        %v1234 = vadd.f32 %v1037, %v1233
        %1235 = vdwg.mxu0
        %vm1236 = vcmp.gt.f32.partialorder %v1231, 0.0
        %vm1237 = vcmp.gt.f32.partialorder %v1234, 0.0
        %v1238 = vmul.f32 %v1231, 0.1
        %v1239 = vmul.f32 %v1234, 0.1
        %v1240 = vsel %vm1236, %v1231, %v1238
        %v1241 = vsel %vm1237, %v1234, %v1239
        %v1244 = vrot.slane %v1240, 1
        %v1245 = vrot.slane %v1240, 2
        %v1246 = vrot.slane %v1240, 3
        %v1247 = vrot.slane %v1240, 4
        %v1248 = vrot.slane %v1240, 5
        %v1249 = vrot.slane %v1240, 6
        %v1250 = vrot.slane %v1240, 7
        %v1251 = vrot.slane %v1241, 1
        %v1252 = vrot.slane %v1241, 2
        %v1253 = vrot.slane %v1241, 3
        %v1254 = vrot.slane %v1241, 4
        %v1255 = vrot.slane %v1241, 5
        %v1256 = vrot.slane %v1241, 6
        %v1257 = vrot.slane %v1241, 7
        %1272 = vst.msk [vmem:[%s491 + $0x2] sm:$0x1] %vm1105, %v1240
        %1273 = vst.msk [vmem:[%s491 + $0xa] sm:$0x1] %vm1105, %v1244
        %1274 = vst.msk [vmem:[%s491 + $0x12] sm:$0x1] %vm1105, %v1245
        %1275 = vst.msk [vmem:[%s491 + $0x1a] sm:$0x1] %vm1105, %v1246
        %1276 = vst.msk [vmem:[%s491 + $0x22] sm:$0x1] %vm1105, %v1247
        %1277 = vst.msk [vmem:[%s491 + $0x2a] sm:$0x1] %vm1105, %v1248
        %1278 = vst.msk [vmem:[%s491 + $0x32] sm:$0x1] %vm1105, %v1249
        %1279 = vst.msk [vmem:[%s491 + $0x3a] sm:$0x1] %vm1105, %v1250
        %1280 = vst.msk [vmem:[%s491 + $0x42] sm:$0x1] %vm1105, %v1241
        %1281 = vst.msk [vmem:[%s491 + $0x4a] sm:$0x1] %vm1105, %v1251
        %1282 = vst.msk [vmem:[%s491 + $0x52] sm:$0x1] %vm1105, %v1252
        %1283 = vst.msk [vmem:[%s491 + $0x5a] sm:$0x1] %vm1105, %v1253
        %1284 = vst.msk [vmem:[%s491 + $0x62] sm:$0x1] %vm1105, %v1254
        %1285 = vst.msk [vmem:[%s491 + $0x6a] sm:$0x1] %vm1105, %v1255
        %1286 = vst.msk [vmem:[%s491 + $0x72] sm:$0x1] %vm1105, %v1256
        %1287 = vst.msk [vmem:[%s491 + $0x7a] sm:$0x1] %vm1105, %v1257
        %1288 = vrot.lane.b32.xlu0 %v997, 32
        %v1289 = vpop.permute.xlu0 %1288
        %1290 = vrot.lane.b32.xlu0 %v1000, 32
        %v1291 = vpop.permute.xlu0 %1290
        %v1292 = vsel %vm1039, %v1289, 0
        %v1294 = vsel %vm1039, %v1291, 0
        %1296 = vmatpush.msra.mxu0 0.0
        %1297 = vmatpush.msra.mxu0 0.0
        %1298 = vmatpush.msra.mxu0 0.0
        %1299 = vmatpush.msra.mxu0 0.0
        %1300 = vmatpush.msra.mxu0 0.0
        %1301 = vmatpush.msra.mxu0 0.0
        %1302 = vmatpush.msra.mxu0 0.0
        %1303 = vmatpush.msra.mxu0 0.0
        %1304 = vmatpush.msra.mxu0 0.0
        %1305 = vmatpush.msra.mxu0 0.0
        %1306 = vmatpush.msra.mxu0 0.0
        %1307 = vmatpush.msra.mxu0 0.0
        %1308 = vmatpush.msra.mxu0 0.0
        %1309 = vmatpush.msra.mxu0 0.0
        %1310 = vmatpush.msra.mxu0 %v1028
        %1311 = vmatpush.msra.mxu0 %v1027
        %1312 = vmatmul.f32.gmra.mxu0 %v1292
        %v1313 = vpop.f32.mrf.mxu0
        %v1314 = vadd.f32 %v1032, %v1313
        %1315 = vmatmul.f32.gmra.mxu0 %v1294
        %v1316 = vpop.f32.mrf.mxu0
        %v1317 = vadd.f32 %v1037, %v1316
        %1318 = vdwg.mxu0
        %vm1319 = vcmp.gt.f32.partialorder %v1314, 0.0
        %vm1320 = vcmp.gt.f32.partialorder %v1317, 0.0
        %v1321 = vmul.f32 %v1314, 0.1
        %v1322 = vmul.f32 %v1317, 0.1
        %v1323 = vsel %vm1319, %v1314, %v1321
        %v1324 = vsel %vm1320, %v1317, %v1322
        %v1327 = vrot.slane %v1323, 1
        %v1328 = vrot.slane %v1323, 2
        %v1329 = vrot.slane %v1323, 3
        %v1330 = vrot.slane %v1323, 4
        %v1331 = vrot.slane %v1323, 5
        %v1332 = vrot.slane %v1323, 6
        %v1333 = vrot.slane %v1323, 7
        %v1334 = vrot.slane %v1324, 1
        %v1335 = vrot.slane %v1324, 2
        %v1336 = vrot.slane %v1324, 3
        %v1337 = vrot.slane %v1324, 4
        %v1338 = vrot.slane %v1324, 5
        %v1339 = vrot.slane %v1324, 6
        %v1340 = vrot.slane %v1324, 7
        %1355 = vst.msk [vmem:[%s491 + $0x3] sm:$0x1] %vm1105, %v1323
        %1356 = vst.msk [vmem:[%s491 + $0xb] sm:$0x1] %vm1105, %v1327
        %1357 = vst.msk [vmem:[%s491 + $0x13] sm:$0x1] %vm1105, %v1328
        %1358 = vst.msk [vmem:[%s491 + $0x1b] sm:$0x1] %vm1105, %v1329
        %1359 = vst.msk [vmem:[%s491 + $0x23] sm:$0x1] %vm1105, %v1330
        %1360 = vst.msk [vmem:[%s491 + $0x2b] sm:$0x1] %vm1105, %v1331
        %1361 = vst.msk [vmem:[%s491 + $0x33] sm:$0x1] %vm1105, %v1332
        %1362 = vst.msk [vmem:[%s491 + $0x3b] sm:$0x1] %vm1105, %v1333
        %1363 = vst.msk [vmem:[%s491 + $0x43] sm:$0x1] %vm1105, %v1324
        %1364 = vst.msk [vmem:[%s491 + $0x4b] sm:$0x1] %vm1105, %v1334
        %1365 = vst.msk [vmem:[%s491 + $0x53] sm:$0x1] %vm1105, %v1335
        %1366 = vst.msk [vmem:[%s491 + $0x5b] sm:$0x1] %vm1105, %v1336
        %1367 = vst.msk [vmem:[%s491 + $0x63] sm:$0x1] %vm1105, %v1337
        %1368 = vst.msk [vmem:[%s491 + $0x6b] sm:$0x1] %vm1105, %v1338
        %1369 = vst.msk [vmem:[%s491 + $0x73] sm:$0x1] %vm1105, %v1339
        %1370 = vst.msk [vmem:[%s491 + $0x7b] sm:$0x1] %vm1105, %v1340
        %v1372 = vsel %vm1039, %v1020, 0
        %v1375 = vsel %vm1039, %v1023, 0
        %1377 = vmatpush.msra.mxu0 0.0
        %1378 = vmatpush.msra.mxu0 0.0
        %1379 = vmatpush.msra.mxu0 0.0
        %1380 = vmatpush.msra.mxu0 0.0
        %1381 = vmatpush.msra.mxu0 0.0
        %1382 = vmatpush.msra.mxu0 0.0
        %1383 = vmatpush.msra.mxu0 0.0
        %1384 = vmatpush.msra.mxu0 0.0
        %1385 = vmatpush.msra.mxu0 0.0
        %1386 = vmatpush.msra.mxu0 0.0
        %1387 = vmatpush.msra.mxu0 0.0
        %1388 = vmatpush.msra.mxu0 0.0
        %1389 = vmatpush.msra.mxu0 0.0
        %1390 = vmatpush.msra.mxu0 0.0
        %1391 = vmatpush.msra.mxu0 %v1028
        %1392 = vmatpush.msra.mxu0 %v1027
        %1393 = vmatmul.f32.gmra.mxu0 %v1372
        %v1394 = vpop.f32.mrf.mxu0
        %v1395 = vadd.f32 %v1032, %v1394
        %1396 = vmatmul.f32.gmra.mxu0 %v1375
        %v1397 = vpop.f32.mrf.mxu0
        %v1398 = vadd.f32 %v1037, %v1397
        %1399 = vdwg.mxu0
        %vm1400 = vcmp.gt.f32.partialorder %v1395, 0.0
        %vm1401 = vcmp.gt.f32.partialorder %v1398, 0.0
        %v1402 = vmul.f32 %v1395, 0.1
        %v1403 = vmul.f32 %v1398, 0.1
        %v1404 = vsel %vm1400, %v1395, %v1402
        %v1405 = vsel %vm1401, %v1398, %v1403
        %v1408 = vrot.slane %v1404, 1
        %v1409 = vrot.slane %v1404, 2
        %v1410 = vrot.slane %v1404, 3
        %v1411 = vrot.slane %v1404, 4
        %v1412 = vrot.slane %v1404, 5
        %v1413 = vrot.slane %v1404, 6
        %v1414 = vrot.slane %v1404, 7
        %v1415 = vrot.slane %v1405, 1
        %v1416 = vrot.slane %v1405, 2
        %v1417 = vrot.slane %v1405, 3
        %v1418 = vrot.slane %v1405, 4
        %v1419 = vrot.slane %v1405, 5
        %v1420 = vrot.slane %v1405, 6
        %v1421 = vrot.slane %v1405, 7
        %1436 = vst.msk [vmem:[%s491 + $0x4] sm:$0x1] %vm1105, %v1404
        %1437 = vst.msk [vmem:[%s491 + $0xc] sm:$0x1] %vm1105, %v1408
        %1438 = vst.msk [vmem:[%s491 + $0x14] sm:$0x1] %vm1105, %v1409
        %1439 = vst.msk [vmem:[%s491 + $0x1c] sm:$0x1] %vm1105, %v1410
        %1440 = vst.msk [vmem:[%s491 + $0x24] sm:$0x1] %vm1105, %v1411
        %1441 = vst.msk [vmem:[%s491 + $0x2c] sm:$0x1] %vm1105, %v1412
        %1442 = vst.msk [vmem:[%s491 + $0x34] sm:$0x1] %vm1105, %v1413
        %1443 = vst.msk [vmem:[%s491 + $0x3c] sm:$0x1] %vm1105, %v1414
        %1444 = vst.msk [vmem:[%s491 + $0x44] sm:$0x1] %vm1105, %v1405
        %1445 = vst.msk [vmem:[%s491 + $0x4c] sm:$0x1] %vm1105, %v1415
        %1446 = vst.msk [vmem:[%s491 + $0x54] sm:$0x1] %vm1105, %v1416
        %1447 = vst.msk [vmem:[%s491 + $0x5c] sm:$0x1] %vm1105, %v1417
        %1448 = vst.msk [vmem:[%s491 + $0x64] sm:$0x1] %vm1105, %v1418
        %1449 = vst.msk [vmem:[%s491 + $0x6c] sm:$0x1] %vm1105, %v1419
        %1450 = vst.msk [vmem:[%s491 + $0x74] sm:$0x1] %vm1105, %v1420
        %1451 = vst.msk [vmem:[%s491 + $0x7c] sm:$0x1] %vm1105, %v1421
        %1452 = vrot.lane.b32.xlu0 %v1020, 96
        %v1453 = vpop.permute.xlu0 %1452
        %1454 = vrot.lane.b32.xlu0 %v1023, 96
        %v1455 = vpop.permute.xlu0 %1454
        %v1456 = vsel %vm1039, %v1453, 0
        %v1458 = vsel %vm1039, %v1455, 0
        %1460 = vmatpush.msra.mxu0 0.0
        %1461 = vmatpush.msra.mxu0 0.0
        %1462 = vmatpush.msra.mxu0 0.0
        %1463 = vmatpush.msra.mxu0 0.0
        %1464 = vmatpush.msra.mxu0 0.0
        %1465 = vmatpush.msra.mxu0 0.0
        %1466 = vmatpush.msra.mxu0 0.0
        %1467 = vmatpush.msra.mxu0 0.0
        %1468 = vmatpush.msra.mxu0 0.0
        %1469 = vmatpush.msra.mxu0 0.0
        %1470 = vmatpush.msra.mxu0 0.0
        %1471 = vmatpush.msra.mxu0 0.0
        %1472 = vmatpush.msra.mxu0 0.0
        %1473 = vmatpush.msra.mxu0 0.0
        %1474 = vmatpush.msra.mxu0 %v1028
        %1475 = vmatpush.msra.mxu0 %v1027
        %1476 = vmatmul.f32.gmra.mxu0 %v1456
        %v1477 = vpop.f32.mrf.mxu0
        %v1478 = vadd.f32 %v1032, %v1477
        %1479 = vmatmul.f32.gmra.mxu0 %v1458
        %v1480 = vpop.f32.mrf.mxu0
        %v1481 = vadd.f32 %v1037, %v1480
        %1482 = vdwg.mxu0
        %vm1483 = vcmp.gt.f32.partialorder %v1478, 0.0
        %vm1484 = vcmp.gt.f32.partialorder %v1481, 0.0
        %v1485 = vmul.f32 %v1478, 0.1
        %v1486 = vmul.f32 %v1481, 0.1
        %v1487 = vsel %vm1483, %v1478, %v1485
        %v1488 = vsel %vm1484, %v1481, %v1486
        %v1491 = vrot.slane %v1487, 1
        %v1492 = vrot.slane %v1487, 2
        %v1493 = vrot.slane %v1487, 3
        %v1494 = vrot.slane %v1487, 4
        %v1495 = vrot.slane %v1487, 5
        %v1496 = vrot.slane %v1487, 6
        %v1497 = vrot.slane %v1487, 7
        %v1498 = vrot.slane %v1488, 1
        %v1499 = vrot.slane %v1488, 2
        %v1500 = vrot.slane %v1488, 3
        %v1501 = vrot.slane %v1488, 4
        %v1502 = vrot.slane %v1488, 5
        %v1503 = vrot.slane %v1488, 6
        %v1504 = vrot.slane %v1488, 7
        %1519 = vst.msk [vmem:[%s491 + $0x5] sm:$0x1] %vm1105, %v1487
        %1520 = vst.msk [vmem:[%s491 + $0xd] sm:$0x1] %vm1105, %v1491
        %1521 = vst.msk [vmem:[%s491 + $0x15] sm:$0x1] %vm1105, %v1492
        %1522 = vst.msk [vmem:[%s491 + $0x1d] sm:$0x1] %vm1105, %v1493
        %1523 = vst.msk [vmem:[%s491 + $0x25] sm:$0x1] %vm1105, %v1494
        %1524 = vst.msk [vmem:[%s491 + $0x2d] sm:$0x1] %vm1105, %v1495
        %1525 = vst.msk [vmem:[%s491 + $0x35] sm:$0x1] %vm1105, %v1496
        %1526 = vst.msk [vmem:[%s491 + $0x3d] sm:$0x1] %vm1105, %v1497
        %1527 = vst.msk [vmem:[%s491 + $0x45] sm:$0x1] %vm1105, %v1488
        %1528 = vst.msk [vmem:[%s491 + $0x4d] sm:$0x1] %vm1105, %v1498
        %1529 = vst.msk [vmem:[%s491 + $0x55] sm:$0x1] %vm1105, %v1499
        %1530 = vst.msk [vmem:[%s491 + $0x5d] sm:$0x1] %vm1105, %v1500
        %1531 = vst.msk [vmem:[%s491 + $0x65] sm:$0x1] %vm1105, %v1501
        %1532 = vst.msk [vmem:[%s491 + $0x6d] sm:$0x1] %vm1105, %v1502
        %1533 = vst.msk [vmem:[%s491 + $0x75] sm:$0x1] %vm1105, %v1503
        %1534 = vst.msk [vmem:[%s491 + $0x7d] sm:$0x1] %vm1105, %v1504
        %1535 = vrot.lane.b32.xlu0 %v1020, 64
        %v1536 = vpop.permute.xlu0 %1535
        %1537 = vrot.lane.b32.xlu0 %v1023, 64
        %v1538 = vpop.permute.xlu0 %1537
        %v1539 = vsel %vm1039, %v1536, 0
        %v1541 = vsel %vm1039, %v1538, 0
        %1543 = vmatpush.msra.mxu0 0.0
        %1544 = vmatpush.msra.mxu0 0.0
        %1545 = vmatpush.msra.mxu0 0.0
        %1546 = vmatpush.msra.mxu0 0.0
        %1547 = vmatpush.msra.mxu0 0.0
        %1548 = vmatpush.msra.mxu0 0.0
        %1549 = vmatpush.msra.mxu0 0.0
        %1550 = vmatpush.msra.mxu0 0.0
        %1551 = vmatpush.msra.mxu0 0.0
        %1552 = vmatpush.msra.mxu0 0.0
        %1553 = vmatpush.msra.mxu0 0.0
        %1554 = vmatpush.msra.mxu0 0.0
        %1555 = vmatpush.msra.mxu0 0.0
        %1556 = vmatpush.msra.mxu0 0.0
        %1557 = vmatpush.msra.mxu0 %v1028
        %1558 = vmatpush.msra.mxu0 %v1027
        %1559 = vmatmul.f32.gmra.mxu0 %v1539
        %v1560 = vpop.f32.mrf.mxu0
        %v1561 = vadd.f32 %v1032, %v1560
        %1562 = vmatmul.f32.gmra.mxu0 %v1541
        %v1563 = vpop.f32.mrf.mxu0
        %v1564 = vadd.f32 %v1037, %v1563
        %1565 = vdwg.mxu0
        %vm1566 = vcmp.gt.f32.partialorder %v1561, 0.0
        %vm1567 = vcmp.gt.f32.partialorder %v1564, 0.0
        %v1568 = vmul.f32 %v1561, 0.1
        %v1569 = vmul.f32 %v1564, 0.1
        %v1570 = vsel %vm1566, %v1561, %v1568
        %v1571 = vsel %vm1567, %v1564, %v1569
        %v1574 = vrot.slane %v1570, 1
        %v1575 = vrot.slane %v1570, 2
        %v1576 = vrot.slane %v1570, 3
        %v1577 = vrot.slane %v1570, 4
        %v1578 = vrot.slane %v1570, 5
        %v1579 = vrot.slane %v1570, 6
        %v1580 = vrot.slane %v1570, 7
        %v1581 = vrot.slane %v1571, 1
        %v1582 = vrot.slane %v1571, 2
        %v1583 = vrot.slane %v1571, 3
        %v1584 = vrot.slane %v1571, 4
        %v1585 = vrot.slane %v1571, 5
        %v1586 = vrot.slane %v1571, 6
        %v1587 = vrot.slane %v1571, 7
        %1602 = vst.msk [vmem:[%s491 + $0x6] sm:$0x1] %vm1105, %v1570
        %1603 = vst.msk [vmem:[%s491 + $0xe] sm:$0x1] %vm1105, %v1574
        %1604 = vst.msk [vmem:[%s491 + $0x16] sm:$0x1] %vm1105, %v1575
        %1605 = vst.msk [vmem:[%s491 + $0x1e] sm:$0x1] %vm1105, %v1576
        %1606 = vst.msk [vmem:[%s491 + $0x26] sm:$0x1] %vm1105, %v1577
        %1607 = vst.msk [vmem:[%s491 + $0x2e] sm:$0x1] %vm1105, %v1578
        %1608 = vst.msk [vmem:[%s491 + $0x36] sm:$0x1] %vm1105, %v1579
        %1609 = vst.msk [vmem:[%s491 + $0x3e] sm:$0x1] %vm1105, %v1580
        %1610 = vst.msk [vmem:[%s491 + $0x46] sm:$0x1] %vm1105, %v1571
        %1611 = vst.msk [vmem:[%s491 + $0x4e] sm:$0x1] %vm1105, %v1581
        %1612 = vst.msk [vmem:[%s491 + $0x56] sm:$0x1] %vm1105, %v1582
        %1613 = vst.msk [vmem:[%s491 + $0x5e] sm:$0x1] %vm1105, %v1583
        %1614 = vst.msk [vmem:[%s491 + $0x66] sm:$0x1] %vm1105, %v1584
        %1615 = vst.msk [vmem:[%s491 + $0x6e] sm:$0x1] %vm1105, %v1585
        %1616 = vst.msk [vmem:[%s491 + $0x76] sm:$0x1] %vm1105, %v1586
        %1617 = vst.msk [vmem:[%s491 + $0x7e] sm:$0x1] %vm1105, %v1587
        %1618 = vrot.lane.b32.xlu0 %v1020, 32
        %v1619 = vpop.permute.xlu0 %1618
        %1620 = vrot.lane.b32.xlu0 %v1023, 32
        %v1621 = vpop.permute.xlu0 %1620
        %v1622 = vsel %vm1039, %v1619, 0
        %v1624 = vsel %vm1039, %v1621, 0
        %1626 = vmatpush.msra.mxu0 0.0
        %1627 = vmatpush.msra.mxu0 0.0
        %1628 = vmatpush.msra.mxu0 0.0
        %1629 = vmatpush.msra.mxu0 0.0
        %1630 = vmatpush.msra.mxu0 0.0
        %1631 = vmatpush.msra.mxu0 0.0
        %1632 = vmatpush.msra.mxu0 0.0
        %1633 = vmatpush.msra.mxu0 0.0
        %1634 = vmatpush.msra.mxu0 0.0
        %1635 = vmatpush.msra.mxu0 0.0
        %1636 = vmatpush.msra.mxu0 0.0
        %1637 = vmatpush.msra.mxu0 0.0
        %1638 = vmatpush.msra.mxu0 0.0
        %1639 = vmatpush.msra.mxu0 0.0
        %1640 = vmatpush.msra.mxu0 %v1028
        %1641 = vmatpush.msra.mxu0 %v1027
        %1642 = vmatmul.f32.gmra.mxu0 %v1622
        %v1643 = vpop.f32.mrf.mxu0
        %v1644 = vadd.f32 %v1032, %v1643
        %1645 = vmatmul.f32.gmra.mxu0 %v1624
        %v1646 = vpop.f32.mrf.mxu0
        %v1647 = vadd.f32 %v1037, %v1646
        %1648 = vdwg.mxu0
        %vm1649 = vcmp.gt.f32.partialorder %v1644, 0.0
        %vm1650 = vcmp.gt.f32.partialorder %v1647, 0.0
        %v1651 = vmul.f32 %v1644, 0.1
        %v1652 = vmul.f32 %v1647, 0.1
        %v1653 = vsel %vm1649, %v1644, %v1651
        %v1654 = vsel %vm1650, %v1647, %v1652
        %v1657 = vrot.slane %v1653, 1
        %v1658 = vrot.slane %v1653, 2
        %v1659 = vrot.slane %v1653, 3
        %v1660 = vrot.slane %v1653, 4
        %v1661 = vrot.slane %v1653, 5
        %v1662 = vrot.slane %v1653, 6
        %v1663 = vrot.slane %v1653, 7
        %v1664 = vrot.slane %v1654, 1
        %v1665 = vrot.slane %v1654, 2
        %v1666 = vrot.slane %v1654, 3
        %v1667 = vrot.slane %v1654, 4
        %v1668 = vrot.slane %v1654, 5
        %v1669 = vrot.slane %v1654, 6
        %v1670 = vrot.slane %v1654, 7
        %1685 = vst.msk [vmem:[%s491 + $0x7] sm:$0x1] %vm1105, %v1653
        %1686 = vst.msk [vmem:[%s491 + $0xf] sm:$0x1] %vm1105, %v1657
        %1687 = vst.msk [vmem:[%s491 + $0x17] sm:$0x1] %vm1105, %v1658
        %1688 = vst.msk [vmem:[%s491 + $0x1f] sm:$0x1] %vm1105, %v1659
        %1689 = vst.msk [vmem:[%s491 + $0x27] sm:$0x1] %vm1105, %v1660
        %1690 = vst.msk [vmem:[%s491 + $0x2f] sm:$0x1] %vm1105, %v1661
        %1691 = vst.msk [vmem:[%s491 + $0x37] sm:$0x1] %vm1105, %v1662
        %1692 = vst.msk [vmem:[%s491 + $0x3f] sm:$0x1] %vm1105, %v1663
        %1693 = vst.msk [vmem:[%s491 + $0x47] sm:$0x1] %vm1105, %v1654
        %1694 = vst.msk [vmem:[%s491 + $0x4f] sm:$0x1] %vm1105, %v1664
        %1695 = vst.msk [vmem:[%s491 + $0x57] sm:$0x1] %vm1105, %v1665
        %1696 = vst.msk [vmem:[%s491 + $0x5f] sm:$0x1] %vm1105, %v1666
        %1697 = vst.msk [vmem:[%s491 + $0x67] sm:$0x1] %vm1105, %v1667
        %1698 = vst.msk [vmem:[%s491 + $0x6f] sm:$0x1] %vm1105, %v1668
        %1699 = vst.msk [vmem:[%s491 + $0x77] sm:$0x1] %vm1105, %v1669
        %1700 = vst.msk [vmem:[%s491 + $0x7f] sm:$0x1] %vm1105, %v1670
        %s1701 = sand.u32 %s277, 1
        %s1702 = scalar_lea.sflag [#allocation5], %s1701
        %s1703 = sand.u32 %s277, 1
        %s1704 = smul.addr %s1703, 16
        %s1705 = scalar_lea.vmem [#allocation8], %s1704
        %s1706 = sand.u32 %s303, 1
        %s1707 = scalar_lea.sflag [#allocation10], %s1706
        %s1708 = sand.u32 %s303, 1
        %s1709 = smul.addr %s1708, 32
        %s1710 = scalar_lea.vmem [#allocation9], %s1709
        %p1711 = scmp.lt.s32.totalorder %s33, 1
        %s1712 = scalar_select %p1711, %s33, 1
        %s1713 = smul.addr %s1712, 16
        %s1714 = smul.addr %s1713, 8
        %s1715 = scalar_lea.vmem %s13, %s1714
        // Predicated region
        $region73: #{tpu_custom_call.1} parent=63 // pred_check
          %p1716 = pneg %p287
        $region74: #{tpu_custom_call.1} parent=63 // pred_check_branch
          %1718 = sbr.rel (%p1716) target = $region76
        $region75: #{tpu_custom_call.1} parent=63 // pred_region
          %1720 = vsyncadd %s1702, 0
          %s1721 = smul.addr %s33, 2
          %s1722 = smul.addr %s1721, 8
          %s1723 = scalar_lea.hbm %s11, %s1722
          %s1725 = sshll.u32 %s1705, 4
          %s1726 = int_to_ptr.vmem [resolvable:$true] %s1725
          %s1727 = sshll.u32 %s1723, 4
          %s1728 = int_to_ptr.hbm [resolvable:$true] %s1727
          %1730 = dma.vmem_to_hbm [thread:$0]  %s1726, 256, %s1728, %s1702
        $region76: #{tpu_custom_call.1} parent=63 // pred_fallthru
          _
        // Predicated region
        $region77: #{tpu_custom_call.1} parent=63 // pred_check
          %p1731 = pneg %p313
        $region78: #{tpu_custom_call.1} parent=63 // pred_check_branch
          %1733 = sbr.rel (%p1731) target = $region80
        $region79: #{tpu_custom_call.1} parent=63 // pred_region
          %1735 = vsyncadd %s1707, 0
          %s1736 = smul.addr %s33, 4
          %s1737 = smul.addr %s1736, 8
          %s1738 = scalar_lea.hbm %s12, %s1737
          %s1739 = sshll.u32 %s1710, 4
          %s1740 = int_to_ptr.vmem [resolvable:$true] %s1739
          %s1741 = sshll.u32 %s1738, 4
          %s1742 = int_to_ptr.hbm [resolvable:$true] %s1741
          %1747 = dma.vmem_to_hbm [thread:$0]  %s1740, 512, %s1742, %s1707, 256, 256, 16
        $region80: #{tpu_custom_call.1} parent=63 // pred_fallthru
          _
        // Predicated region
        $region81: #{tpu_custom_call.1} parent=63 // pred_check
          %p1748 = pneg %p339
        $region82: #{tpu_custom_call.1} parent=63 // pred_check_branch
          %1750 = sbr.rel (%p1748) target = $region84
        $region83: #{tpu_custom_call.1} parent=63 // pred_region
          _
        $region84: #{tpu_custom_call.1} parent=63 // pred_fallthru
          _
      $region64: #{tpu_custom_call.1} parent=5 // pred_fallthru
        _
      %p1751 = scmp.le.s32.totalorder 2, %s28
      // Predicated region
      $region85: #{tpu_custom_call.1} parent=5 // pred_check
        %p1752 = pneg %p1751
      $region86: #{tpu_custom_call.1} parent=5 // pred_check_branch
        %1754 = sbr.rel (%p1752) target = $region88
      $region87: #{tpu_custom_call.1} parent=5 // pred_region
        %s1755 = ssub.s32 %s28, 2
        // Predicated region
        $region89: #{tpu_custom_call.1} parent=87 // pred_check
          %p1756 = pneg %p293
        $region90: #{tpu_custom_call.1} parent=87 // pred_check_branch
          %1758 = sbr.rel (%p1756) target = $region92
        $region91: #{tpu_custom_call.1} parent=87 // pred_region
          %s1759 = sand.u32 %s278, 1
          %s1760 = scalar_lea.sflag [#allocation5], %s1759
          %s1761 = sand.u32 %s278, 1
          %s1762 = smul.addr %s1761, 16
          %s1763 = scalar_lea.vmem [#allocation8], %s1762
          %1765 = dma.done %s1760, 256
        $region92: #{tpu_custom_call.1} parent=87 // pred_fallthru
          _
        // Predicated region
        $region93: #{tpu_custom_call.1} parent=87 // pred_check
          %p1766 = pneg %p319
        $region94: #{tpu_custom_call.1} parent=87 // pred_check_branch
          %1768 = sbr.rel (%p1766) target = $region96
        $region95: #{tpu_custom_call.1} parent=87 // pred_region
          %s1769 = sand.u32 %s304, 1
          %s1770 = scalar_lea.sflag [#allocation10], %s1769
          %s1771 = sand.u32 %s304, 1
          %s1772 = smul.addr %s1771, 32
          %s1773 = scalar_lea.vmem [#allocation9], %s1772
          %1775 = dma.done %s1770, 512
        $region96: #{tpu_custom_call.1} parent=87 // pred_fallthru
          _
        // Predicated region
        $region97: #{tpu_custom_call.1} parent=87 // pred_check
          %p1776 = pneg %p345
        $region98: #{tpu_custom_call.1} parent=87 // pred_check_branch
          %1778 = sbr.rel (%p1776) target = $region100
        $region99: #{tpu_custom_call.1} parent=87 // pred_region
          %p1779 = scmp.lt.s32.totalorder %s34, 1
          %s1780 = scalar_select %p1779, %s34, 1
          %s1781 = smul.addr %s1780, 16
          %s1782 = smul.addr %s1781, 8
          %s1783 = scalar_lea.vmem %s13, %s1782
        $region100: #{tpu_custom_call.1} parent=87 // pred_fallthru
          _
      $region88: #{tpu_custom_call.1} parent=5 // pred_fallthru
        _
    $region6: #{tpu_custom_call.1} parent=1 // loop_footer
      %s32 = sadd.s32 1, %s28
    $region7: #{tpu_custom_call.1} parent=1 // loop_footer_branch
      %27 = sbr.rel target = $region3
    $region8: #{tpu_custom_call.1} parent=1 // loop_exit
      _
    %1784 = vsyncpa [#allocation4], 1
    %s1785 = scalar_lea.sflag [#allocation4], 1
    %1786 = vsyncpa %s1785, 1
    %1787 = vsyncpa [#allocation7], 1
    %1788 = vsyncpa [#allocation5], 1
    %s1789 = scalar_lea.sflag [#allocation5], 1
    %1790 = vsyncpa %s1789, 1
    %1791 = vsyncpa [#allocation10], 1
    %s1792 = scalar_lea.sflag [#allocation10], 1
    %1793 = vsyncpa %s1792, 1

</llo_original>
